<compile_context>
chip_gen: v5e
topology: v5e:2x2
jax: 0.10.0
libtpu: 0.0.40
codegen_flags: <defaults>
</compile_context>

<pallas_src>
import jax
import jax.numpy as jnp
from jax.experimental import pallas as pl
from jax.experimental.pallas import tpu as pltpu

_VMEM = pl.BlockSpec(memory_space=pltpu.MemorySpace.VMEM)


# ---------------------------------------------------------------------------
# Pallas kernels
# ---------------------------------------------------------------------------
def _conv_relu_kernel(w_ref, p_ref, b_ref, o_ref):
    """o = relu(w @ p + b).   w:(Co,K)  p:(K,M)  b:(Co,1)  o:(Co,M) lane-dense."""
    acc = jnp.dot(w_ref[...], p_ref[...], preferred_element_type=jnp.float32)
    o_ref[...] = jnp.maximum(acc + b_ref[...], 0.0)


def _max4_kernel(a_ref, b_ref, c_ref, d_ref, o_ref):
    """Elementwise max of the four members of each 2x2 window (MaxPool2d(2,2))."""
    o_ref[...] = jnp.maximum(jnp.maximum(a_ref[...], b_ref[...]),
                             jnp.maximum(c_ref[...], d_ref[...]))


def _head_kernel(x_ref, w1_ref, b1_ref, w2_ref, b2_ref, w3_ref, b3_ref,
                 lab_ref, score_ref, loss_ref):
    """Fused MLP head: fc1+relu -> fc2+relu -> fc3 -> log_softmax -> CE loss."""
    x = x_ref[...]                                                   # (N, 400)
    h1 = jnp.maximum(
        jnp.dot(x, w1_ref[...], preferred_element_type=jnp.float32)
        + b1_ref[...], 0.0)                                          # (N, 120)
    h2 = jnp.maximum(
        jnp.dot(h1, w2_ref[...], preferred_element_type=jnp.float32)
        + b2_ref[...], 0.0)                                          # (N, 100)
    logits = (jnp.dot(h2, w3_ref[...], preferred_element_type=jnp.float32)
              + b3_ref[...])                                         # (N, 10)

    # score = log_softmax(logits, dim=1)
    m = jnp.max(logits, axis=-1, keepdims=True)
    z = logits - m
    lse = jnp.log(jnp.sum(jnp.exp(z), axis=-1, keepdims=True))
    score = z - lse                                                  # (N, 10)
    score_ref[...] = score

    # loss = F.cross_entropy(score, label) == NLL(log_softmax(score), label)
    # (the PyTorch module applies log_softmax twice -- replicated here)
    m2 = jnp.max(score, axis=-1, keepdims=True)
    z2 = score - m2
    lse2 = m2 + jnp.log(jnp.sum(jnp.exp(z2), axis=-1, keepdims=True))
    ls2 = score - lse2                                               # (N, 10)

    n, ncls = score.shape
    cols = jax.lax.broadcasted_iota(jnp.int32, (n, ncls), 1)
    onehot = cols == lab_ref[...]                                    # (N, 10)
    picked = jnp.sum(jnp.where(onehot, ls2, 0.0), axis=-1, keepdims=True)
    # mean via multiply-by-reciprocal (constant), not a divide
    loss_ref[...] = -jnp.sum(picked, axis=0, keepdims=True) * (1.0 / n)


# ---------------------------------------------------------------------------
# Wrappers (im2col / pool-window slicing is layout plumbing only)
# ---------------------------------------------------------------------------
def conv2d_relu(x, w, b):
    """x:(N,C,H,W), w:(Co,C,k,k), b:(Co,) -> relu(conv_valid(x,w)+b) as NCHW."""
    N, C, H, W = x.shape
    Co, _, k, _ = w.shape
    Ho, Wo = H - k + 1, W - k + 1
    # im2col, K on the sublane axis and N*Ho*Wo on the lane axis (lane-dense).
    slabs = []
    for c in range(C):
        for dh in range(k):
            for dw in range(k):
                slabs.append(x[:, c, dh:dh + Ho, dw:dw + Wo])        # (N,Ho,Wo)
    patches = jnp.stack(slabs, axis=0).reshape(C * k * k, N * Ho * Wo)
    wf = w.reshape(Co, C * k * k)

    out = pl.pallas_call(
        _conv_relu_kernel,
        out_shape=jax.ShapeDtypeStruct((Co, N * Ho * Wo), jnp.float32),
        in_specs=[_VMEM, _VMEM, _VMEM],
        out_specs=_VMEM,
    )(wf, patches, b.reshape(Co, 1))
    return out.reshape(Co, N, Ho, Wo).transpose(1, 0, 2, 3)          # (N,Co,Ho,Wo)


def maxpool_2x2(y):
    """MaxPool2d(kernel=2, stride=2) on NCHW."""
    N, C, H, W = y.shape
    Hh, Wh = H // 2, W // 2
    flat = lambda t: t.reshape(N * C, Hh * Wh)
    a = flat(y[:, :, 0::2, 0::2])
    b = flat(y[:, :, 0::2, 1::2])
    c = flat(y[:, :, 1::2, 0::2])
    d = flat(y[:, :, 1::2, 1::2])
    out = pl.pallas_call(
        _max4_kernel,
        out_shape=jax.ShapeDtypeStruct((N * C, Hh * Wh), jnp.float32),
        in_specs=[_VMEM, _VMEM, _VMEM, _VMEM],
        out_specs=_VMEM,
    )(a, b, c, d)
    return out.reshape(N, C, Hh, Wh)


def mlp_head(x_flat, params, label):
    N = x_flat.shape[0]
    score, loss = pl.pallas_call(
        _head_kernel,
        out_shape=(jax.ShapeDtypeStruct((N, 10), jnp.float32),
                   jax.ShapeDtypeStruct((1, 1), jnp.float32)),
        in_specs=[_VMEM] * 8,
        out_specs=(_VMEM, _VMEM),
    )(x_flat,
      params["fc1_w"].T, params["fc1_b"].reshape(1, -1),
      params["fc2_w"].T, params["fc2_b"].reshape(1, -1),
      params["fc3_w"].T, params["fc3_b"].reshape(1, -1),
      label.reshape(N, 1).astype(jnp.int32))
    return score, loss[0, 0]


def cnn_cifar_forward(params, img, label):
    """Pallas equivalent of CNNCifar.forward({'img': img, 'label': label})."""
    y = conv2d_relu(img, params["conv1_w"], params["conv1_b"])       # (N,6,28,28)
    y = maxpool_2x2(y)                                               # (N,6,14,14)
    y = conv2d_relu(y, params["conv2_w"], params["conv2_b"])         # (N,16,10,10)
    y = maxpool_2x2(y)                                               # (N,16,5,5)
    xf = y.reshape(y.shape[0], 16 * 5 * 5)                           # (N,400)
    score, loss = mlp_head(xf, params, label)
    return {"score": score, "loss": loss}


# ---------------------------------------------------------------------------
# Pure-JAX reference (for correctness check only)
# ---------------------------------------------------------------------------
def _ref_forward(params, img, label):
    hp = jax.lax.Precision.HIGHEST

    def conv(x, w, b):
        y = jax.lax.conv_general_dilated(
            x, w, (1, 1), "VALID",
            dimension_numbers=("NCHW", "OIHW", "NCHW"), precision=hp)
        return jax.nn.relu(y + b.reshape(1, -1, 1, 1))

    def pool(y):
        return jax.lax.reduce_window(y, -jnp.inf, jax.lax.max,
                                     (1, 1, 2, 2), (1, 1, 2, 2), "VALID")

    y = pool(conv(img, params["conv1_w"], params["conv1_b"]))
    y = pool(conv(y, params["conv2_w"], params["conv2_b"]))
    xf = y.reshape(y.shape[0], -1)
    h1 = jax.nn.relu(jnp.dot(xf, params["fc1_w"].T, precision=hp) + params["fc1_b"])
    h2 = jax.nn.relu(jnp.dot(h1, params["fc2_w"].T, precision=hp) + params["fc2_b"])
    logits = jnp.dot(h2, params["fc3_w"].T, precision=hp) + params["fc3_b"]
    score = jax.nn.log_softmax(logits, axis=1)
    ls2 = jax.nn.log_softmax(score, axis=1)
    loss = -jnp.mean(ls2[jnp.arange(label.shape[0]), label])
    return score, loss


# ---------------------------------------------------------------------------
if __name__ == "__main__":
    key = jax.random.PRNGKey(0)
    ks = jax.random.split(key, 12)

    def _unif(k, shape, fan_in):
        bound = float(fan_in) ** -0.5
        return jax.random.uniform(k, shape, dtype=jnp.float32,
                                  minval=-bound, maxval=bound)

    params = {
        "conv1_w": _unif(ks[0], (6, 3, 5, 5), 3 * 25),
        "conv1_b": _unif(ks[1], (6,), 3 * 25),
        "conv2_w": _unif(ks[2], (16, 6, 5, 5), 6 * 25),
        "conv2_b": _unif(ks[3], (16,), 6 * 25),
        "fc1_w": _unif(ks[4], (120, 400), 400),
        "fc1_b": _unif(ks[5], (120,), 400),
        "fc2_w": _unif(ks[6], (100, 120), 120),
        "fc2_b": _unif(ks[7], (100,), 120),
        "fc3_w": _unif(ks[8], (10, 100), 100),
        "fc3_b": _unif(ks[9], (10,), 100),
    }

    N = 2
    img = jax.random.normal(ks[10], (N, 3, 32, 32), dtype=jnp.float32)
    label = jax.random.randint(ks[11], (N,), 0, 10)

    fwd = jax.jit(cnn_cifar_forward)
    out = fwd(params, img, label)
    out = jax.block_until_ready(out)

    ref_score, ref_loss = _ref_forward(params, img, label)

    assert out["score"].shape == (N, 10)
    assert jnp.allclose(out["score"], ref_score, rtol=1e-3, atol=1e-3)
    assert jnp.allclose(out["loss"], ref_loss, rtol=1e-3, atol=1e-3)
    assert bool(jnp.isfinite(out["loss"]))

    print("KERNEL_OK")
</pallas_src>

<mosaic_0001>
module attributes {stable_mosaic.version = 11 : i64} {
  func.func @_conv_relu_kernel(%arg0: memref<6x75xf32, #tpu.memory_space<vmem>>, %arg1: memref<75x1568xf32, #tpu.memory_space<vmem>>, %arg2: memref<6x1xf32, #tpu.memory_space<vmem>>, %arg3: memref<6x1568xf32, #tpu.memory_space<vmem>>) attributes {dimension_semantics = [], scalar_prefetch = 0 : i64, scratch_operands = 0 : i64, tpu.core_type = #tpu.core_type<tc>} {
    %c0 = arith.constant 0 : index
    %c0_0 = arith.constant 0 : index
    %0 = vector.load %arg0[%c0, %c0_0] : memref<6x75xf32, #tpu.memory_space<vmem>>, vector<6x75xf32>
    %c0_1 = arith.constant 0 : index
    %c0_2 = arith.constant 0 : index
    %1 = vector.load %arg1[%c0_1, %c0_2] : memref<75x1568xf32, #tpu.memory_space<vmem>>, vector<75x1568xf32>
    %cst = arith.constant dense<0.000000e+00> : vector<6x1568xf32>
    %2 = tpu.matmul %0, %1, %cst {dimension_numbers = #tpu.dot_dimension_numbers<[1], [0], [0], [1], [0, 0, 1, 1], [], []>} : vector<6x75xf32>, vector<75x1568xf32>, vector<6x1568xf32> -> vector<6x1568xf32>
    %c0_3 = arith.constant 0 : index
    %c0_4 = arith.constant 0 : index
    %3 = vector.load %arg2[%c0_3, %c0_4] : memref<6x1xf32, #tpu.memory_space<vmem>>, vector<6x1xf32>
    %4 = vector.broadcast %3 : vector<6x1xf32> to vector<6x1568xf32>
    %5 = arith.addf %2, %4 : vector<6x1568xf32>
    %cst_5 = arith.constant 0.000000e+00 : f32
    %6 = vector.broadcast %cst_5 : f32 to vector<6x1568xf32>
    %7 = arith.maximumf %5, %6 : vector<6x1568xf32>
    %c0_6 = arith.constant 0 : index
    %c0_7 = arith.constant 0 : index
    %8 = vector.load %arg3[%c0_6, %c0_7] : memref<6x1568xf32, #tpu.memory_space<vmem>>, vector<6x1568xf32>
    tpu.vector_store %arg3[%c0_6, %c0_7], %7 {strides = array<i32>} : memref<6x1568xf32, #tpu.memory_space<vmem>>, vector<6x1568xf32>,
    return
  }
}

module attributes {stable_mosaic.version = 11 : i64} {
  func.func @_max4_kernel(%arg0: memref<12x196xf32, #tpu.memory_space<vmem>>, %arg1: memref<12x196xf32, #tpu.memory_space<vmem>>, %arg2: memref<12x196xf32, #tpu.memory_space<vmem>>, %arg3: memref<12x196xf32, #tpu.memory_space<vmem>>, %arg4: memref<12x196xf32, #tpu.memory_space<vmem>>) attributes {dimension_semantics = [], scalar_prefetch = 0 : i64, scratch_operands = 0 : i64, tpu.core_type = #tpu.core_type<tc>} {
    %c0 = arith.constant 0 : index
    %c0_0 = arith.constant 0 : index
    %0 = vector.load %arg0[%c0, %c0_0] : memref<12x196xf32, #tpu.memory_space<vmem>>, vector<12x196xf32>
    %c0_1 = arith.constant 0 : index
    %c0_2 = arith.constant 0 : index
    %1 = vector.load %arg1[%c0_1, %c0_2] : memref<12x196xf32, #tpu.memory_space<vmem>>, vector<12x196xf32>
    %2 = arith.maximumf %0, %1 : vector<12x196xf32>
    %c0_3 = arith.constant 0 : index
    %c0_4 = arith.constant 0 : index
    %3 = vector.load %arg2[%c0_3, %c0_4] : memref<12x196xf32, #tpu.memory_space<vmem>>, vector<12x196xf32>
    %c0_5 = arith.constant 0 : index
    %c0_6 = arith.constant 0 : index
    %4 = vector.load %arg3[%c0_5, %c0_6] : memref<12x196xf32, #tpu.memory_space<vmem>>, vector<12x196xf32>
    %5 = arith.maximumf %3, %4 : vector<12x196xf32>
    %6 = arith.maximumf %2, %5 : vector<12x196xf32>
    %c0_7 = arith.constant 0 : index
    %c0_8 = arith.constant 0 : index
    %7 = vector.load %arg4[%c0_7, %c0_8] : memref<12x196xf32, #tpu.memory_space<vmem>>, vector<12x196xf32>
    tpu.vector_store %arg4[%c0_7, %c0_8], %6 {strides = array<i32>} : memref<12x196xf32, #tpu.memory_space<vmem>>, vector<12x196xf32>,
    return
  }
}

module attributes {stable_mosaic.version = 11 : i64} {
  func.func @_conv_relu_kernel(%arg0: memref<16x150xf32, #tpu.memory_space<vmem>>, %arg1: memref<150x200xf32, #tpu.memory_space<vmem>>, %arg2: memref<16x1xf32, #tpu.memory_space<vmem>>, %arg3: memref<16x200xf32, #tpu.memory_space<vmem>>) attributes {dimension_semantics = [], scalar_prefetch = 0 : i64, scratch_operands = 0 : i64, tpu.core_type = #tpu.core_type<tc>} {
    %c0 = arith.constant 0 : index
    %c0_0 = arith.constant 0 : index
    %0 = vector.load %arg0[%c0, %c0_0] : memref<16x150xf32, #tpu.memory_space<vmem>>, vector<16x150xf32>
    %c0_1 = arith.constant 0 : index
    %c0_2 = arith.constant 0 : index
    %1 = vector.load %arg1[%c0_1, %c0_2] : memref<150x200xf32, #tpu.memory_space<vmem>>, vector<150x200xf32>
    %cst = arith.constant dense<0.000000e+00> : vector<16x200xf32>
    %2 = tpu.matmul %0, %1, %cst {dimension_numbers = #tpu.dot_dimension_numbers<[1], [0], [0], [1], [0, 0, 1, 1], [], []>} : vector<16x150xf32>, vector<150x200xf32>, vector<16x200xf32> -> vector<16x200xf32>
    %c0_3 = arith.constant 0 : index
    %c0_4 = arith.constant 0 : index
    %3 = vector.load %arg2[%c0_3, %c0_4] : memref<16x1xf32, #tpu.memory_space<vmem>>, vector<16x1xf32>
    %4 = vector.broadcast %3 : vector<16x1xf32> to vector<16x200xf32>
    %5 = arith.addf %2, %4 : vector<16x200xf32>
    %cst_5 = arith.constant 0.000000e+00 : f32
    %6 = vector.broadcast %cst_5 : f32 to vector<16x200xf32>
    %7 = arith.maximumf %5, %6 : vector<16x200xf32>
    %c0_6 = arith.constant 0 : index
    %c0_7 = arith.constant 0 : index
    %8 = vector.load %arg3[%c0_6, %c0_7] : memref<16x200xf32, #tpu.memory_space<vmem>>, vector<16x200xf32>
    tpu.vector_store %arg3[%c0_6, %c0_7], %7 {strides = array<i32>} : memref<16x200xf32, #tpu.memory_space<vmem>>, vector<16x200xf32>,
    return
  }
}

module attributes {stable_mosaic.version = 11 : i64} {
  func.func @_max4_kernel(%arg0: memref<32x25xf32, #tpu.memory_space<vmem>>, %arg1: memref<32x25xf32, #tpu.memory_space<vmem>>, %arg2: memref<32x25xf32, #tpu.memory_space<vmem>>, %arg3: memref<32x25xf32, #tpu.memory_space<vmem>>, %arg4: memref<32x25xf32, #tpu.memory_space<vmem>>) attributes {dimension_semantics = [], scalar_prefetch = 0 : i64, scratch_operands = 0 : i64, tpu.core_type = #tpu.core_type<tc>} {
    %c0 = arith.constant 0 : index
    %c0_0 = arith.constant 0 : index
    %0 = vector.load %arg0[%c0, %c0_0] : memref<32x25xf32, #tpu.memory_space<vmem>>, vector<32x25xf32>
    %c0_1 = arith.constant 0 : index
    %c0_2 = arith.constant 0 : index
    %1 = vector.load %arg1[%c0_1, %c0_2] : memref<32x25xf32, #tpu.memory_space<vmem>>, vector<32x25xf32>
    %2 = arith.maximumf %0, %1 : vector<32x25xf32>
    %c0_3 = arith.constant 0 : index
    %c0_4 = arith.constant 0 : index
    %3 = vector.load %arg2[%c0_3, %c0_4] : memref<32x25xf32, #tpu.memory_space<vmem>>, vector<32x25xf32>
    %c0_5 = arith.constant 0 : index
    %c0_6 = arith.constant 0 : index
    %4 = vector.load %arg3[%c0_5, %c0_6] : memref<32x25xf32, #tpu.memory_space<vmem>>, vector<32x25xf32>
    %5 = arith.maximumf %3, %4 : vector<32x25xf32>
    %6 = arith.maximumf %2, %5 : vector<32x25xf32>
    %c0_7 = arith.constant 0 : index
    %c0_8 = arith.constant 0 : index
    %7 = vector.load %arg4[%c0_7, %c0_8] : memref<32x25xf32, #tpu.memory_space<vmem>>, vector<32x25xf32>
    tpu.vector_store %arg4[%c0_7, %c0_8], %6 {strides = array<i32>} : memref<32x25xf32, #tpu.memory_space<vmem>>, vector<32x25xf32>,
    return
  }
}

module attributes {stable_mosaic.version = 11 : i64} {
  func.func @_head_kernel(%arg0: memref<2x400xf32, #tpu.memory_space<vmem>>, %arg1: memref<400x120xf32, #tpu.memory_space<vmem>>, %arg2: memref<1x120xf32, #tpu.memory_space<vmem>>, %arg3: memref<120x100xf32, #tpu.memory_space<vmem>>, %arg4: memref<1x100xf32, #tpu.memory_space<vmem>>, %arg5: memref<100x10xf32, #tpu.memory_space<vmem>>, %arg6: memref<1x10xf32, #tpu.memory_space<vmem>>, %arg7: memref<2x1xi32, #tpu.memory_space<vmem>>, %arg8: memref<2x10xf32, #tpu.memory_space<vmem>>, %arg9: memref<1x1xf32, #tpu.memory_space<vmem>>) attributes {dimension_semantics = [], scalar_prefetch = 0 : i64, scratch_operands = 0 : i64, tpu.core_type = #tpu.core_type<tc>} {
    %c0 = arith.constant 0 : index
    %c0_0 = arith.constant 0 : index
    %0 = vector.load %arg0[%c0, %c0_0] : memref<2x400xf32, #tpu.memory_space<vmem>>, vector<2x400xf32>
    %c0_1 = arith.constant 0 : index
    %c0_2 = arith.constant 0 : index
    %1 = vector.load %arg1[%c0_1, %c0_2] : memref<400x120xf32, #tpu.memory_space<vmem>>, vector<400x120xf32>
    %cst = arith.constant dense<0.000000e+00> : vector<2x120xf32>
    %2 = tpu.matmul %0, %1, %cst {dimension_numbers = #tpu.dot_dimension_numbers<[1], [0], [0], [1], [0, 0, 1, 1], [], []>} : vector<2x400xf32>, vector<400x120xf32>, vector<2x120xf32> -> vector<2x120xf32>
    %c0_3 = arith.constant 0 : index
    %c0_4 = arith.constant 0 : index
    %3 = vector.load %arg2[%c0_3, %c0_4] : memref<1x120xf32, #tpu.memory_space<vmem>>, vector<1x120xf32>
    %4 = vector.broadcast %3 : vector<1x120xf32> to vector<2x120xf32>
    %5 = arith.addf %2, %4 : vector<2x120xf32>
    %cst_5 = arith.constant 0.000000e+00 : f32
    %6 = vector.broadcast %cst_5 : f32 to vector<2x120xf32>
    %7 = arith.maximumf %5, %6 : vector<2x120xf32>
    %c0_6 = arith.constant 0 : index
    %c0_7 = arith.constant 0 : index
    %8 = vector.load %arg3[%c0_6, %c0_7] : memref<120x100xf32, #tpu.memory_space<vmem>>, vector<120x100xf32>
    %cst_8 = arith.constant dense<0.000000e+00> : vector<2x100xf32>
    %9 = tpu.matmul %7, %8, %cst_8 {dimension_numbers = #tpu.dot_dimension_numbers<[1], [0], [0], [1], [0, 0, 1, 1], [], []>} : vector<2x120xf32>, vector<120x100xf32>, vector<2x100xf32> -> vector<2x100xf32>
    %c0_9 = arith.constant 0 : index
    %c0_10 = arith.constant 0 : index
    %10 = vector.load %arg4[%c0_9, %c0_10] : memref<1x100xf32, #tpu.memory_space<vmem>>, vector<1x100xf32>
    %11 = vector.broadcast %10 : vector<1x100xf32> to vector<2x100xf32>
    %12 = arith.addf %9, %11 : vector<2x100xf32>
    %cst_11 = arith.constant 0.000000e+00 : f32
    %13 = vector.broadcast %cst_11 : f32 to vector<2x100xf32>
    %14 = arith.maximumf %12, %13 : vector<2x100xf32>
    %c0_12 = arith.constant 0 : index
    %c0_13 = arith.constant 0 : index
    %15 = vector.load %arg5[%c0_12, %c0_13] : memref<100x10xf32, #tpu.memory_space<vmem>>, vector<100x10xf32>
    %cst_14 = arith.constant dense<0.000000e+00> : vector<2x10xf32>
    %16 = tpu.matmul %14, %15, %cst_14 {dimension_numbers = #tpu.dot_dimension_numbers<[1], [0], [0], [1], [0, 0, 1, 1], [], []>} : vector<2x100xf32>, vector<100x10xf32>, vector<2x10xf32> -> vector<2x10xf32>
    %c0_15 = arith.constant 0 : index
    %c0_16 = arith.constant 0 : index
    %17 = vector.load %arg6[%c0_15, %c0_16] : memref<1x10xf32, #tpu.memory_space<vmem>>, vector<1x10xf32>
    %18 = vector.broadcast %17 : vector<1x10xf32> to vector<2x10xf32>
    %19 = arith.addf %16, %18 : vector<2x10xf32>
    %cst_17 = arith.constant dense<0xFF800000> : vector<2xf32>
    %20 = vector.multi_reduction <maximumf>, %19, %cst_17 [1] : vector<2x10xf32> to vector<2xf32>
    %21 = vector.shape_cast %20 : vector<2xf32> to vector<2x1xf32>
    %22 = vector.broadcast %21 : vector<2x1xf32> to vector<2x10xf32>
    %23 = arith.subf %19, %22 : vector<2x10xf32>
    %24 = math.exp %23 : vector<2x10xf32>
    %cst_18 = arith.constant dense<0.000000e+00> : vector<2xf32>
    %25 = vector.multi_reduction <add>, %24, %cst_18 [1] : vector<2x10xf32> to vector<2xf32>
    %26 = vector.shape_cast %25 : vector<2xf32> to vector<2x1xf32>
    %27 = math.log %26 : vector<2x1xf32>
    %28 = vector.broadcast %27 : vector<2x1xf32> to vector<2x10xf32>
    %29 = arith.subf %23, %28 : vector<2x10xf32>
    %c0_19 = arith.constant 0 : index
    %c0_20 = arith.constant 0 : index
    %30 = vector.load %arg8[%c0_19, %c0_20] : memref<2x10xf32, #tpu.memory_space<vmem>>, vector<2x10xf32>
    tpu.vector_store %arg8[%c0_19, %c0_20], %29 {strides = array<i32>} : memref<2x10xf32, #tpu.memory_space<vmem>>, vector<2x10xf32>,
    %cst_21 = arith.constant dense<0xFF800000> : vector<2xf32>
    %31 = vector.multi_reduction <maximumf>, %29, %cst_21 [1] : vector<2x10xf32> to vector<2xf32>
    %32 = vector.shape_cast %31 : vector<2xf32> to vector<2x1xf32>
    %33 = vector.broadcast %32 : vector<2x1xf32> to vector<2x10xf32>
    %34 = arith.subf %29, %33 : vector<2x10xf32>
    %35 = math.exp %34 : vector<2x10xf32>
    %cst_22 = arith.constant dense<0.000000e+00> : vector<2xf32>
    %36 = vector.multi_reduction <add>, %35, %cst_22 [1] : vector<2x10xf32> to vector<2xf32>
    %37 = vector.shape_cast %36 : vector<2xf32> to vector<2x1xf32>
    %38 = math.log %37 : vector<2x1xf32>
    %39 = arith.addf %32, %38 : vector<2x1xf32>
    %40 = vector.broadcast %39 : vector<2x1xf32> to vector<2x10xf32>
    %41 = arith.subf %29, %40 : vector<2x10xf32>
    %42 = tpu.iota {dimensions = array<i32: 1>} : vector<2x10xi32>
    %c0_23 = arith.constant 0 : index
    %c0_24 = arith.constant 0 : index
    %43 = vector.load %arg7[%c0_23, %c0_24] : memref<2x1xi32, #tpu.memory_space<vmem>>, vector<2x1xi32>
    %44 = vector.broadcast %43 : vector<2x1xi32> to vector<2x10xi32>
    %45 = arith.cmpi eq, %42, %44 : vector<2x10xi32>
    %cst_25 = arith.constant 0.000000e+00 : f32
    %46 = vector.broadcast %cst_25 : f32 to vector<2x10xf32>
    %47 = arith.select %45, %41, %46 : vector<2x10xi1>, vector<2x10xf32>
    %cst_26 = arith.constant dense<0.000000e+00> : vector<2xf32>
    %48 = vector.multi_reduction <add>, %47, %cst_26 [1] : vector<2x10xf32> to vector<2xf32>
    %49 = vector.shape_cast %48 : vector<2xf32> to vector<2x1xf32>
    %cst_27 = arith.constant dense<0.000000e+00> : vector<1xf32>
    %50 = vector.multi_reduction <add>, %49, %cst_27 [0] : vector<2x1xf32> to vector<1xf32>
    %51 = vector.shape_cast %50 : vector<1xf32> to vector<1x1xf32>
    %cst_28 = arith.constant 0.000000e+00 : f32
    %52 = vector.broadcast %cst_28 : f32 to vector<1x1xf32>
    %53 = arith.subf %52, %51 : vector<1x1xf32>
    %cst_29 = arith.constant 5.000000e-01 : f32
    %54 = vector.broadcast %cst_29 : f32 to vector<1x1xf32>
    %55 = arith.mulf %53, %54 : vector<1x1xf32>
    %c0_30 = arith.constant 0 : index
    %c0_31 = arith.constant 0 : index
    %56 = vector.load %arg9[%c0_30, %c0_31] : memref<1x1xf32, #tpu.memory_space<vmem>>, vector<1x1xf32>
    tpu.vector_store %arg9[%c0_30, %c0_31], %55 {strides = array<i32>} : memref<1x1xf32, #tpu.memory_space<vmem>>, vector<1x1xf32>,
    return
  }
}

</mosaic_0001>

<llo_original>
// kernel: cnn_cifar_forward.6
$region0: #{cnn_cifar_forward.6}
  #allocation0 [shape = 'u32[]', space=smem, size = 0x4, offset = 0x4, fixed_abs, tag = 'smem constant byte address 0x4 - core index']
  #allocation1 [shape = 'u32[72,128]{1,0:T(1,128)}', space=vmem, size = 0x9000, scoped, tag = 'internal scratch']
  %s0 = inlined_call_operand.vmem [shape: f32[12,196], index: 0, kind: input, shape index: {}]
  %s1 = inlined_call_operand.vmem [shape: f32[12,196], index: 1, kind: input, shape index: {}]
  %s2 = inlined_call_operand.vmem [shape: f32[12,196], index: 2, kind: input, shape index: {}]
  %s3 = inlined_call_operand.vmem [shape: f32[12,196], index: 3, kind: input, shape index: {}]
  %s4 = inlined_call_operand.vmem [shape: f32[12,196], index: 4, kind: output, shape index: {}]
  %s5 = sld [smem:[#allocation0]]
  $region26: #{cnn_cifar_forward.6} parent=0
    _
  %s7 = ssub.s32 1, %s5
  %s8 = scalar_select 0, %s7, %s5
  // Predicated region
  $region2: #{cnn_cifar_forward.6} parent=0 // pred_check
    _
  $region3: #{cnn_cifar_forward.6} parent=0 // pred_check_branch
    %10 = sbr.rel (0) target = $region5
  $region4: #{cnn_cifar_forward.6} parent=0 // pred_region
    _
  $region5: #{cnn_cifar_forward.6} parent=0 // pred_fallthru
    _
  // Predicated region
  $region6: #{cnn_cifar_forward.6} parent=0 // pred_check
    _
  $region7: #{cnn_cifar_forward.6} parent=0 // pred_check_branch
    %12 = sbr.rel (0) target = $region9
  $region8: #{cnn_cifar_forward.6} parent=0 // pred_region
    _
  $region9: #{cnn_cifar_forward.6} parent=0 // pred_fallthru
    _
  // Predicated region
  $region10: #{cnn_cifar_forward.6} parent=0 // pred_check
    _
  $region11: #{cnn_cifar_forward.6} parent=0 // pred_check_branch
    %14 = sbr.rel (0) target = $region13
  $region12: #{cnn_cifar_forward.6} parent=0 // pred_region
    _
  $region13: #{cnn_cifar_forward.6} parent=0 // pred_fallthru
    _
  // Predicated region
  $region14: #{cnn_cifar_forward.6} parent=0 // pred_check
    _
  $region15: #{cnn_cifar_forward.6} parent=0 // pred_check_branch
    %16 = sbr.rel (0) target = $region17
  $region16: #{cnn_cifar_forward.6} parent=0 // pred_region
    _
  $region17: #{cnn_cifar_forward.6} parent=0 // pred_fallthru
    _
  %v17 = vld [vmem:[%s0] sm:$0xff]
  %v18 = vld [vmem:[%s0 + $0x8] sm:$0xff]
  %v19 = vld [vmem:[%s0 + $0x10] sm:$0xf]
  %v20 = vld [vmem:[%s0 + $0x18] sm:$0xf]
  %v21 = vld [vmem:[%s1] sm:$0xff]
  %v22 = vld [vmem:[%s1 + $0x8] sm:$0xff]
  %v23 = vld [vmem:[%s1 + $0x10] sm:$0xf]
  %v24 = vld [vmem:[%s1 + $0x18] sm:$0xf]
  %v25 = vmax.f32 %v17, %v21
  %v26 = vmax.f32 %v18, %v22
  %v27 = vmax.f32 %v19, %v23
  %v28 = vmax.f32 %v20, %v24
  %v29 = vld [vmem:[%s2] sm:$0xff]
  %v30 = vld [vmem:[%s2 + $0x8] sm:$0xff]
  %v31 = vld [vmem:[%s2 + $0x10] sm:$0xf]
  %v32 = vld [vmem:[%s2 + $0x18] sm:$0xf]
  %v33 = vld [vmem:[%s3] sm:$0xff]
  %v34 = vld [vmem:[%s3 + $0x8] sm:$0xff]
  %v35 = vld [vmem:[%s3 + $0x10] sm:$0xf]
  %v36 = vld [vmem:[%s3 + $0x18] sm:$0xf]
  %v37 = vmax.f32 %v29, %v33
  %v38 = vmax.f32 %v30, %v34
  %v39 = vmax.f32 %v31, %v35
  %v40 = vmax.f32 %v32, %v36
  %v41 = vmax.f32 %v25, %v37
  %v42 = vmax.f32 %v26, %v38
  %v43 = vmax.f32 %v27, %v39
  %v44 = vmax.f32 %v28, %v40
  %45 = vst [vmem:[%s4] sm:$0xff] %v41
  %vm46 = vcmask 556032
  %47 = vst.msk [vmem:[%s4 + $0x8] sm:$0xff] %vm46, %v42
  %48 = vst [vmem:[%s4 + $0x10] sm:$0xf] %v43
  %vm49 = vcmask 551936
  %50 = vst.msk [vmem:[%s4 + $0x18] sm:$0xf] %vm49, %v44
  // Predicated region
  $region18: #{cnn_cifar_forward.6} parent=0 // pred_check
    _
  $region19: #{cnn_cifar_forward.6} parent=0 // pred_check_branch
    %52 = sbr.rel (0) target = $region21
  $region20: #{cnn_cifar_forward.6} parent=0 // pred_region
    _
  $region21: #{cnn_cifar_forward.6} parent=0 // pred_fallthru
    _
  // Predicated region
  $region22: #{cnn_cifar_forward.6} parent=0 // pred_check
    _
  $region23: #{cnn_cifar_forward.6} parent=0 // pred_check_branch
    %54 = sbr.rel (0) target = $region25
  $region24: #{cnn_cifar_forward.6} parent=0 // pred_region
    _
  $region25: #{cnn_cifar_forward.6} parent=0 // pred_fallthru
    _

// kernel: cnn_cifar_forward.5
$region0: #{cnn_cifar_forward.5}
  #allocation0 [shape = 'u32[]', space=smem, size = 0x4, offset = 0x4, fixed_abs, tag = 'smem constant byte address 0x4 - core index']
  #allocation1 [shape = 'u32[72,128]{1,0:T(1,128)}', space=vmem, size = 0x9000, scoped, tag = 'internal scratch']
  %s0 = inlined_call_operand.vmem [shape: f32[6,75], index: 0, kind: input, shape index: {}]
  %s1 = inlined_call_operand.vmem [shape: f32[75,1568], index: 1, kind: input, shape index: {}]
  %s2 = inlined_call_operand.vmem [shape: f32[6,1], index: 2, kind: input, shape index: {}]
  %s3 = inlined_call_operand.vmem [shape: f32[6,1568], index: 3, kind: output, shape index: {}]
  %s4 = sld [smem:[#allocation0]]
  $region22: #{cnn_cifar_forward.5} parent=0
    _
  %s6 = ssub.s32 1, %s4
  %s7 = scalar_select 0, %s6, %s4
  // Predicated region
  $region2: #{cnn_cifar_forward.5} parent=0 // pred_check
    _
  $region3: #{cnn_cifar_forward.5} parent=0 // pred_check_branch
    %9 = sbr.rel (0) target = $region5
  $region4: #{cnn_cifar_forward.5} parent=0 // pred_region
    _
  $region5: #{cnn_cifar_forward.5} parent=0 // pred_fallthru
    _
  // Predicated region
  $region6: #{cnn_cifar_forward.5} parent=0 // pred_check
    _
  $region7: #{cnn_cifar_forward.5} parent=0 // pred_check_branch
    %11 = sbr.rel (0) target = $region9
  $region8: #{cnn_cifar_forward.5} parent=0 // pred_region
    _
  $region9: #{cnn_cifar_forward.5} parent=0 // pred_fallthru
    _
  // Predicated region
  $region10: #{cnn_cifar_forward.5} parent=0 // pred_check
    _
  $region11: #{cnn_cifar_forward.5} parent=0 // pred_check_branch
    %13 = sbr.rel (0) target = $region13
  $region12: #{cnn_cifar_forward.5} parent=0 // pred_region
    _
  $region13: #{cnn_cifar_forward.5} parent=0 // pred_fallthru
    _
  %v14 = vld [vmem:[%s0] sm:$0x3f]
  %v15 = vld [vmem:[%s1] sm:$0xff]
  %v16 = vld [vmem:[%s1 + $0x8] sm:$0xff]
  %v17 = vld [vmem:[%s1 + $0x10] sm:$0xff]
  %v18 = vld [vmem:[%s1 + $0x18] sm:$0xff]
  %v19 = vld [vmem:[%s1 + $0x20] sm:$0xff]
  %v20 = vld [vmem:[%s1 + $0x28] sm:$0xff]
  %v21 = vld [vmem:[%s1 + $0x30] sm:$0xff]
  %v22 = vld [vmem:[%s1 + $0x38] sm:$0xff]
  %v23 = vld [vmem:[%s1 + $0x40] sm:$0xff]
  %v24 = vld [vmem:[%s1 + $0x48] sm:$0xff]
  %v25 = vld [vmem:[%s1 + $0x50] sm:$0xff]
  %v26 = vld [vmem:[%s1 + $0x58] sm:$0xff]
  %v27 = vld [vmem:[%s1 + $0x60] sm:$0xff]
  %v28 = vld [vmem:[%s1 + $0x68] sm:$0xff]
  %v29 = vld [vmem:[%s1 + $0x70] sm:$0xff]
  %v30 = vld [vmem:[%s1 + $0x78] sm:$0xff]
  %v31 = vld [vmem:[%s1 + $0x80] sm:$0xff]
  %v32 = vld [vmem:[%s1 + $0x88] sm:$0xff]
  %v33 = vld [vmem:[%s1 + $0x90] sm:$0xff]
  %v34 = vld [vmem:[%s1 + $0x98] sm:$0xff]
  %v35 = vld [vmem:[%s1 + $0xa0] sm:$0xff]
  %v36 = vld [vmem:[%s1 + $0xa8] sm:$0xff]
  %v37 = vld [vmem:[%s1 + $0xb0] sm:$0xff]
  %v38 = vld [vmem:[%s1 + $0xb8] sm:$0xff]
  %v39 = vld [vmem:[%s1 + $0xc0] sm:$0xff]
  %v40 = vld [vmem:[%s1 + $0xc8] sm:$0xff]
  %v41 = vld [vmem:[%s1 + $0xd0] sm:$0xff]
  %v42 = vld [vmem:[%s1 + $0xd8] sm:$0xff]
  %v43 = vld [vmem:[%s1 + $0xe0] sm:$0xff]
  %v44 = vld [vmem:[%s1 + $0xe8] sm:$0xff]
  %v45 = vld [vmem:[%s1 + $0xf0] sm:$0xff]
  %v46 = vld [vmem:[%s1 + $0xf8] sm:$0xff]
  %v47 = vld [vmem:[%s1 + $0x100] sm:$0xff]
  %v48 = vld [vmem:[%s1 + $0x108] sm:$0xff]
  %v49 = vld [vmem:[%s1 + $0x110] sm:$0xff]
  %v50 = vld [vmem:[%s1 + $0x118] sm:$0xff]
  %v51 = vld [vmem:[%s1 + $0x120] sm:$0xff]
  %v52 = vld [vmem:[%s1 + $0x128] sm:$0xff]
  %v53 = vld [vmem:[%s1 + $0x130] sm:$0xff]
  %v54 = vld [vmem:[%s1 + $0x138] sm:$0xff]
  %v55 = vld [vmem:[%s1 + $0x140] sm:$0xff]
  %v56 = vld [vmem:[%s1 + $0x148] sm:$0xff]
  %v57 = vld [vmem:[%s1 + $0x150] sm:$0xff]
  %v58 = vld [vmem:[%s1 + $0x158] sm:$0xff]
  %v59 = vld [vmem:[%s1 + $0x160] sm:$0xff]
  %v60 = vld [vmem:[%s1 + $0x168] sm:$0xff]
  %v61 = vld [vmem:[%s1 + $0x170] sm:$0xff]
  %v62 = vld [vmem:[%s1 + $0x178] sm:$0xff]
  %v63 = vld [vmem:[%s1 + $0x180] sm:$0xff]
  %v64 = vld [vmem:[%s1 + $0x188] sm:$0xff]
  %v65 = vld [vmem:[%s1 + $0x190] sm:$0xff]
  %v66 = vld [vmem:[%s1 + $0x198] sm:$0xff]
  %v67 = vld [vmem:[%s1 + $0x1a0] sm:$0xff]
  %v68 = vld [vmem:[%s1 + $0x1a8] sm:$0xff]
  %v69 = vld [vmem:[%s1 + $0x1b0] sm:$0xff]
  %v70 = vld [vmem:[%s1 + $0x1b8] sm:$0xff]
  %v71 = vld [vmem:[%s1 + $0x1c0] sm:$0xff]
  %v72 = vld [vmem:[%s1 + $0x1c8] sm:$0xff]
  %v73 = vld [vmem:[%s1 + $0x1d0] sm:$0xff]
  %v74 = vld [vmem:[%s1 + $0x1d8] sm:$0xff]
  %v75 = vld [vmem:[%s1 + $0x1e0] sm:$0xff]
  %v76 = vld [vmem:[%s1 + $0x1e8] sm:$0xff]
  %v77 = vld [vmem:[%s1 + $0x1f0] sm:$0xff]
  %v78 = vld [vmem:[%s1 + $0x1f8] sm:$0xff]
  %v79 = vld [vmem:[%s1 + $0x200] sm:$0xff]
  %v80 = vld [vmem:[%s1 + $0x208] sm:$0xff]
  %v81 = vld [vmem:[%s1 + $0x210] sm:$0xff]
  %v82 = vld [vmem:[%s1 + $0x218] sm:$0xff]
  %v83 = vld [vmem:[%s1 + $0x220] sm:$0xff]
  %v84 = vld [vmem:[%s1 + $0x228] sm:$0xff]
  %v85 = vld [vmem:[%s1 + $0x230] sm:$0xff]
  %v86 = vld [vmem:[%s1 + $0x238] sm:$0xff]
  %v87 = vld [vmem:[%s1 + $0x240] sm:$0xff]
  %v88 = vld [vmem:[%s1 + $0x248] sm:$0xff]
  %v89 = vld [vmem:[%s1 + $0x250] sm:$0xff]
  %v90 = vld [vmem:[%s1 + $0x258] sm:$0xff]
  %v91 = vld [vmem:[%s1 + $0x260] sm:$0xff]
  %v92 = vld [vmem:[%s1 + $0x268] sm:$0xff]
  %v93 = vld [vmem:[%s1 + $0x270] sm:$0xff]
  %v94 = vld [vmem:[%s1 + $0x278] sm:$0xff]
  %v95 = vld [vmem:[%s1 + $0x280] sm:$0xff]
  %v96 = vld [vmem:[%s1 + $0x288] sm:$0xff]
  %v97 = vld [vmem:[%s1 + $0x290] sm:$0xff]
  %v98 = vld [vmem:[%s1 + $0x298] sm:$0xff]
  %v99 = vld [vmem:[%s1 + $0x2a0] sm:$0xff]
  %v100 = vld [vmem:[%s1 + $0x2a8] sm:$0xff]
  %v101 = vld [vmem:[%s1 + $0x2b0] sm:$0xff]
  %v102 = vld [vmem:[%s1 + $0x2b8] sm:$0xff]
  %v103 = vld [vmem:[%s1 + $0x2c0] sm:$0xff]
  %v104 = vld [vmem:[%s1 + $0x2c8] sm:$0xff]
  %v105 = vld [vmem:[%s1 + $0x2d0] sm:$0xff]
  %v106 = vld [vmem:[%s1 + $0x2d8] sm:$0xff]
  %v107 = vld [vmem:[%s1 + $0x2e0] sm:$0xff]
  %v108 = vld [vmem:[%s1 + $0x2e8] sm:$0xff]
  %v109 = vld [vmem:[%s1 + $0x2f0] sm:$0xff]
  %v110 = vld [vmem:[%s1 + $0x2f8] sm:$0xff]
  %v111 = vld [vmem:[%s1 + $0x300] sm:$0xff]
  %v112 = vld [vmem:[%s1 + $0x308] sm:$0xff]
  %v113 = vld [vmem:[%s1 + $0x310] sm:$0xff]
  %v114 = vld [vmem:[%s1 + $0x318] sm:$0xff]
  %v115 = vld [vmem:[%s1 + $0x320] sm:$0xff]
  %v116 = vld [vmem:[%s1 + $0x328] sm:$0xff]
  %v117 = vld [vmem:[%s1 + $0x330] sm:$0xff]
  %v118 = vld [vmem:[%s1 + $0x338] sm:$0xff]
  %v119 = vld [vmem:[%s1 + $0x340] sm:$0xff]
  %v120 = vld [vmem:[%s1 + $0x348] sm:$0xff]
  %v121 = vld [vmem:[%s1 + $0x350] sm:$0xff]
  %v122 = vld [vmem:[%s1 + $0x358] sm:$0xff]
  %v123 = vld [vmem:[%s1 + $0x360] sm:$0xff]
  %v124 = vld [vmem:[%s1 + $0x368] sm:$0xff]
  %v125 = vld [vmem:[%s1 + $0x370] sm:$0xff]
  %v126 = vld [vmem:[%s1 + $0x378] sm:$0xff]
  %v127 = vld [vmem:[%s1 + $0x380] sm:$0xff]
  %v128 = vld [vmem:[%s1 + $0x388] sm:$0xff]
  %v129 = vld [vmem:[%s1 + $0x390] sm:$0xff]
  %v130 = vld [vmem:[%s1 + $0x398] sm:$0xff]
  %v131 = vld [vmem:[%s1 + $0x3a0] sm:$0xff]
  %v132 = vld [vmem:[%s1 + $0x3a8] sm:$0x7]
  %v133 = vld [vmem:[%s1 + $0x3b0] sm:$0x7]
  %v134 = vld [vmem:[%s1 + $0x3b8] sm:$0x7]
  %v135 = vld [vmem:[%s1 + $0x3c0] sm:$0x7]
  %v136 = vld [vmem:[%s1 + $0x3c8] sm:$0x7]
  %v137 = vld [vmem:[%s1 + $0x3d0] sm:$0x7]
  %v138 = vld [vmem:[%s1 + $0x3d8] sm:$0x7]
  %v139 = vld [vmem:[%s1 + $0x3e0] sm:$0x7]
  %v140 = vld [vmem:[%s1 + $0x3e8] sm:$0x7]
  %v141 = vld [vmem:[%s1 + $0x3f0] sm:$0x7]
  %v142 = vld [vmem:[%s1 + $0x3f8] sm:$0x7]
  %v143 = vld [vmem:[%s1 + $0x400] sm:$0x7]
  %v144 = vld [vmem:[%s1 + $0x408] sm:$0x7]
  %v145 = vld [vmem:[%s2] sm:$0x3f]
  %147 = vset.pattern.permute.xlu0 0
  %148 = vperm.xlu0 %147, %v145
  %v149 = vpop.permute.xlu0 %148
  %vm151 = vcmask 613376
  %v153 = vsel %vm151, %v14, 0
  %vm155 = vcmask 1042432
  %v157 = vsel %vm155, %v132, 0
  %v160 = vsel %vm155, %v133, 0
  %v163 = vsel %vm155, %v134, 0
  %v166 = vsel %vm155, %v135, 0
  %v169 = vsel %vm155, %v136, 0
  %v172 = vsel %vm155, %v137, 0
  %v175 = vsel %vm155, %v138, 0
  %v178 = vsel %vm155, %v139, 0
  %v181 = vsel %vm155, %v140, 0
  %v184 = vsel %vm155, %v141, 0
  %v187 = vsel %vm155, %v142, 0
  %v190 = vsel %vm155, %v143, 0
  %v193 = vsel %vm155, %v144, 0
  %195 = vmatpush.msra.mxu0 0.0
  %196 = vmatpush.msra.mxu0 0.0
  %197 = vmatpush.msra.mxu0 0.0
  %198 = vmatpush.msra.mxu0 0.0
  %199 = vmatpush.msra.mxu0 0.0
  %200 = vmatpush.msra.mxu0 0.0
  %201 = vmatpush.msra.mxu0 %v157
  %202 = vmatpush.msra.mxu0 %v119
  %203 = vmatpush.msra.mxu0 %v106
  %204 = vmatpush.msra.mxu0 %v93
  %205 = vmatpush.msra.mxu0 %v80
  %206 = vmatpush.msra.mxu0 %v67
  %207 = vmatpush.msra.mxu0 %v54
  %208 = vmatpush.msra.mxu0 %v41
  %209 = vmatpush.msra.mxu0 %v28
  %210 = vmatpush.msra.mxu0 %v15
  %211 = vmatmul.f32.gmra.mxu0 %v153
  %v212 = vpop.f32.mrf.mxu0
  %v213 = vadd.f32 %v149, %v212
  %214 = vdwg.mxu0
  %215 = vmatpush.msra.mxu0 0.0
  %216 = vmatpush.msra.mxu0 0.0
  %217 = vmatpush.msra.mxu0 0.0
  %218 = vmatpush.msra.mxu0 0.0
  %219 = vmatpush.msra.mxu0 0.0
  %220 = vmatpush.msra.mxu0 0.0
  %221 = vmatpush.msra.mxu0 %v160
  %222 = vmatpush.msra.mxu0 %v120
  %223 = vmatpush.msra.mxu0 %v107
  %224 = vmatpush.msra.mxu0 %v94
  %225 = vmatpush.msra.mxu0 %v81
  %226 = vmatpush.msra.mxu0 %v68
  %227 = vmatpush.msra.mxu0 %v55
  %228 = vmatpush.msra.mxu0 %v42
  %229 = vmatpush.msra.mxu0 %v29
  %230 = vmatpush.msra.mxu0 %v16
  %231 = vmatmul.f32.gmra.mxu0 %v153
  %v232 = vpop.f32.mrf.mxu0
  %v233 = vadd.f32 %v149, %v232
  %234 = vdwg.mxu0
  %235 = vmatpush.msra.mxu0 0.0
  %236 = vmatpush.msra.mxu0 0.0
  %237 = vmatpush.msra.mxu0 0.0
  %238 = vmatpush.msra.mxu0 0.0
  %239 = vmatpush.msra.mxu0 0.0
  %240 = vmatpush.msra.mxu0 0.0
  %241 = vmatpush.msra.mxu0 %v163
  %242 = vmatpush.msra.mxu0 %v121
  %243 = vmatpush.msra.mxu0 %v108
  %244 = vmatpush.msra.mxu0 %v95
  %245 = vmatpush.msra.mxu0 %v82
  %246 = vmatpush.msra.mxu0 %v69
  %247 = vmatpush.msra.mxu0 %v56
  %248 = vmatpush.msra.mxu0 %v43
  %249 = vmatpush.msra.mxu0 %v30
  %250 = vmatpush.msra.mxu0 %v17
  %251 = vmatmul.f32.gmra.mxu0 %v153
  %v252 = vpop.f32.mrf.mxu0
  %v253 = vadd.f32 %v149, %v252
  %254 = vdwg.mxu0
  %255 = vmatpush.msra.mxu0 0.0
  %256 = vmatpush.msra.mxu0 0.0
  %257 = vmatpush.msra.mxu0 0.0
  %258 = vmatpush.msra.mxu0 0.0
  %259 = vmatpush.msra.mxu0 0.0
  %260 = vmatpush.msra.mxu0 0.0
  %261 = vmatpush.msra.mxu0 %v166
  %262 = vmatpush.msra.mxu0 %v122
  %263 = vmatpush.msra.mxu0 %v109
  %264 = vmatpush.msra.mxu0 %v96
  %265 = vmatpush.msra.mxu0 %v83
  %266 = vmatpush.msra.mxu0 %v70
  %267 = vmatpush.msra.mxu0 %v57
  %268 = vmatpush.msra.mxu0 %v44
  %269 = vmatpush.msra.mxu0 %v31
  %270 = vmatpush.msra.mxu0 %v18
  %271 = vmatmul.f32.gmra.mxu0 %v153
  %v272 = vpop.f32.mrf.mxu0
  %v273 = vadd.f32 %v149, %v272
  %274 = vdwg.mxu0
  %275 = vmatpush.msra.mxu0 0.0
  %276 = vmatpush.msra.mxu0 0.0
  %277 = vmatpush.msra.mxu0 0.0
  %278 = vmatpush.msra.mxu0 0.0
  %279 = vmatpush.msra.mxu0 0.0
  %280 = vmatpush.msra.mxu0 0.0
  %281 = vmatpush.msra.mxu0 %v169
  %282 = vmatpush.msra.mxu0 %v123
  %283 = vmatpush.msra.mxu0 %v110
  %284 = vmatpush.msra.mxu0 %v97
  %285 = vmatpush.msra.mxu0 %v84
  %286 = vmatpush.msra.mxu0 %v71
  %287 = vmatpush.msra.mxu0 %v58
  %288 = vmatpush.msra.mxu0 %v45
  %289 = vmatpush.msra.mxu0 %v32
  %290 = vmatpush.msra.mxu0 %v19
  %291 = vmatmul.f32.gmra.mxu0 %v153
  %v292 = vpop.f32.mrf.mxu0
  %v293 = vadd.f32 %v149, %v292
  %294 = vdwg.mxu0
  %295 = vmatpush.msra.mxu0 0.0
  %296 = vmatpush.msra.mxu0 0.0
  %297 = vmatpush.msra.mxu0 0.0
  %298 = vmatpush.msra.mxu0 0.0
  %299 = vmatpush.msra.mxu0 0.0
  %300 = vmatpush.msra.mxu0 0.0
  %301 = vmatpush.msra.mxu0 %v172
  %302 = vmatpush.msra.mxu0 %v124
  %303 = vmatpush.msra.mxu0 %v111
  %304 = vmatpush.msra.mxu0 %v98
  %305 = vmatpush.msra.mxu0 %v85
  %306 = vmatpush.msra.mxu0 %v72
  %307 = vmatpush.msra.mxu0 %v59
  %308 = vmatpush.msra.mxu0 %v46
  %309 = vmatpush.msra.mxu0 %v33
  %310 = vmatpush.msra.mxu0 %v20
  %311 = vmatmul.f32.gmra.mxu0 %v153
  %v312 = vpop.f32.mrf.mxu0
  %v313 = vadd.f32 %v149, %v312
  %314 = vdwg.mxu0
  %315 = vmatpush.msra.mxu0 0.0
  %316 = vmatpush.msra.mxu0 0.0
  %317 = vmatpush.msra.mxu0 0.0
  %318 = vmatpush.msra.mxu0 0.0
  %319 = vmatpush.msra.mxu0 0.0
  %320 = vmatpush.msra.mxu0 0.0
  %321 = vmatpush.msra.mxu0 %v175
  %322 = vmatpush.msra.mxu0 %v125
  %323 = vmatpush.msra.mxu0 %v112
  %324 = vmatpush.msra.mxu0 %v99
  %325 = vmatpush.msra.mxu0 %v86
  %326 = vmatpush.msra.mxu0 %v73
  %327 = vmatpush.msra.mxu0 %v60
  %328 = vmatpush.msra.mxu0 %v47
  %329 = vmatpush.msra.mxu0 %v34
  %330 = vmatpush.msra.mxu0 %v21
  %331 = vmatmul.f32.gmra.mxu0 %v153
  %v332 = vpop.f32.mrf.mxu0
  %v333 = vadd.f32 %v149, %v332
  %334 = vdwg.mxu0
  %335 = vmatpush.msra.mxu0 0.0
  %336 = vmatpush.msra.mxu0 0.0
  %337 = vmatpush.msra.mxu0 0.0
  %338 = vmatpush.msra.mxu0 0.0
  %339 = vmatpush.msra.mxu0 0.0
  %340 = vmatpush.msra.mxu0 0.0
  %341 = vmatpush.msra.mxu0 %v178
  %342 = vmatpush.msra.mxu0 %v126
  %343 = vmatpush.msra.mxu0 %v113
  %344 = vmatpush.msra.mxu0 %v100
  %345 = vmatpush.msra.mxu0 %v87
  %346 = vmatpush.msra.mxu0 %v74
  %347 = vmatpush.msra.mxu0 %v61
  %348 = vmatpush.msra.mxu0 %v48
  %349 = vmatpush.msra.mxu0 %v35
  %350 = vmatpush.msra.mxu0 %v22
  %351 = vmatmul.f32.gmra.mxu0 %v153
  %v352 = vpop.f32.mrf.mxu0
  %v353 = vadd.f32 %v149, %v352
  %354 = vdwg.mxu0
  %355 = vmatpush.msra.mxu0 0.0
  %356 = vmatpush.msra.mxu0 0.0
  %357 = vmatpush.msra.mxu0 0.0
  %358 = vmatpush.msra.mxu0 0.0
  %359 = vmatpush.msra.mxu0 0.0
  %360 = vmatpush.msra.mxu0 0.0
  %361 = vmatpush.msra.mxu0 %v181
  %362 = vmatpush.msra.mxu0 %v127
  %363 = vmatpush.msra.mxu0 %v114
  %364 = vmatpush.msra.mxu0 %v101
  %365 = vmatpush.msra.mxu0 %v88
  %366 = vmatpush.msra.mxu0 %v75
  %367 = vmatpush.msra.mxu0 %v62
  %368 = vmatpush.msra.mxu0 %v49
  %369 = vmatpush.msra.mxu0 %v36
  %370 = vmatpush.msra.mxu0 %v23
  %371 = vmatmul.f32.gmra.mxu0 %v153
  %v372 = vpop.f32.mrf.mxu0
  %v373 = vadd.f32 %v149, %v372
  %374 = vdwg.mxu0
  %375 = vmatpush.msra.mxu0 0.0
  %376 = vmatpush.msra.mxu0 0.0
  %377 = vmatpush.msra.mxu0 0.0
  %378 = vmatpush.msra.mxu0 0.0
  %379 = vmatpush.msra.mxu0 0.0
  %380 = vmatpush.msra.mxu0 0.0
  %381 = vmatpush.msra.mxu0 %v184
  %382 = vmatpush.msra.mxu0 %v128
  %383 = vmatpush.msra.mxu0 %v115
  %384 = vmatpush.msra.mxu0 %v102
  %385 = vmatpush.msra.mxu0 %v89
  %386 = vmatpush.msra.mxu0 %v76
  %387 = vmatpush.msra.mxu0 %v63
  %388 = vmatpush.msra.mxu0 %v50
  %389 = vmatpush.msra.mxu0 %v37
  %390 = vmatpush.msra.mxu0 %v24
  %391 = vmatmul.f32.gmra.mxu0 %v153
  %v392 = vpop.f32.mrf.mxu0
  %v393 = vadd.f32 %v149, %v392
  %394 = vdwg.mxu0
  %395 = vmatpush.msra.mxu0 0.0
  %396 = vmatpush.msra.mxu0 0.0
  %397 = vmatpush.msra.mxu0 0.0
  %398 = vmatpush.msra.mxu0 0.0
  %399 = vmatpush.msra.mxu0 0.0
  %400 = vmatpush.msra.mxu0 0.0
  %401 = vmatpush.msra.mxu0 %v187
  %402 = vmatpush.msra.mxu0 %v129
  %403 = vmatpush.msra.mxu0 %v116
  %404 = vmatpush.msra.mxu0 %v103
  %405 = vmatpush.msra.mxu0 %v90
  %406 = vmatpush.msra.mxu0 %v77
  %407 = vmatpush.msra.mxu0 %v64
  %408 = vmatpush.msra.mxu0 %v51
  %409 = vmatpush.msra.mxu0 %v38
  %410 = vmatpush.msra.mxu0 %v25
  %411 = vmatmul.f32.gmra.mxu0 %v153
  %v412 = vpop.f32.mrf.mxu0
  %v413 = vadd.f32 %v149, %v412
  %414 = vdwg.mxu0
  %415 = vmatpush.msra.mxu0 0.0
  %416 = vmatpush.msra.mxu0 0.0
  %417 = vmatpush.msra.mxu0 0.0
  %418 = vmatpush.msra.mxu0 0.0
  %419 = vmatpush.msra.mxu0 0.0
  %420 = vmatpush.msra.mxu0 0.0
  %421 = vmatpush.msra.mxu0 %v190
  %422 = vmatpush.msra.mxu0 %v130
  %423 = vmatpush.msra.mxu0 %v117
  %424 = vmatpush.msra.mxu0 %v104
  %425 = vmatpush.msra.mxu0 %v91
  %426 = vmatpush.msra.mxu0 %v78
  %427 = vmatpush.msra.mxu0 %v65
  %428 = vmatpush.msra.mxu0 %v52
  %429 = vmatpush.msra.mxu0 %v39
  %430 = vmatpush.msra.mxu0 %v26
  %431 = vmatmul.f32.gmra.mxu0 %v153
  %v432 = vpop.f32.mrf.mxu0
  %v433 = vadd.f32 %v149, %v432
  %434 = vdwg.mxu0
  %435 = vmatpush.msra.mxu0 0.0
  %436 = vmatpush.msra.mxu0 0.0
  %437 = vmatpush.msra.mxu0 0.0
  %438 = vmatpush.msra.mxu0 0.0
  %439 = vmatpush.msra.mxu0 0.0
  %440 = vmatpush.msra.mxu0 0.0
  %441 = vmatpush.msra.mxu0 %v193
  %442 = vmatpush.msra.mxu0 %v131
  %443 = vmatpush.msra.mxu0 %v118
  %444 = vmatpush.msra.mxu0 %v105
  %445 = vmatpush.msra.mxu0 %v92
  %446 = vmatpush.msra.mxu0 %v79
  %447 = vmatpush.msra.mxu0 %v66
  %448 = vmatpush.msra.mxu0 %v53
  %449 = vmatpush.msra.mxu0 %v40
  %450 = vmatpush.msra.mxu0 %v27
  %451 = vmatmul.f32.gmra.mxu0 %v153
  %v452 = vpop.f32.mrf.mxu0
  %v453 = vadd.f32 %v149, %v452
  %454 = vdwg.mxu0
  %v455 = vmax.f32 %v213, 0.0
  %v456 = vmax.f32 %v233, 0.0
  %v457 = vmax.f32 %v253, 0.0
  %v458 = vmax.f32 %v273, 0.0
  %v459 = vmax.f32 %v293, 0.0
  %v460 = vmax.f32 %v313, 0.0
  %v461 = vmax.f32 %v333, 0.0
  %v462 = vmax.f32 %v353, 0.0
  %v463 = vmax.f32 %v373, 0.0
  %v464 = vmax.f32 %v393, 0.0
  %v465 = vmax.f32 %v413, 0.0
  %v466 = vmax.f32 %v433, 0.0
  %v467 = vmax.f32 %v453, 0.0
  %468 = vst [vmem:[%s3] sm:$0x3f] %v455
  %469 = vst [vmem:[%s3 + $0x8] sm:$0x3f] %v456
  %470 = vst [vmem:[%s3 + $0x10] sm:$0x3f] %v457
  %471 = vst [vmem:[%s3 + $0x18] sm:$0x3f] %v458
  %472 = vst [vmem:[%s3 + $0x20] sm:$0x3f] %v459
  %473 = vst [vmem:[%s3 + $0x28] sm:$0x3f] %v460
  %474 = vst [vmem:[%s3 + $0x30] sm:$0x3f] %v461
  %475 = vst [vmem:[%s3 + $0x38] sm:$0x3f] %v462
  %476 = vst [vmem:[%s3 + $0x40] sm:$0x3f] %v463
  %477 = vst [vmem:[%s3 + $0x48] sm:$0x3f] %v464
  %478 = vst [vmem:[%s3 + $0x50] sm:$0x3f] %v465
  %479 = vst [vmem:[%s3 + $0x58] sm:$0x3f] %v466
  %vm480 = vcmask 259072
  %481 = vst.msk [vmem:[%s3 + $0x60] sm:$0x3f] %vm480, %v467
  // Predicated region
  $region14: #{cnn_cifar_forward.5} parent=0 // pred_check
    _
  $region15: #{cnn_cifar_forward.5} parent=0 // pred_check_branch
    %483 = sbr.rel (0) target = $region17
  $region16: #{cnn_cifar_forward.5} parent=0 // pred_region
    _
  $region17: #{cnn_cifar_forward.5} parent=0 // pred_fallthru
    _
  // Predicated region
  $region18: #{cnn_cifar_forward.5} parent=0 // pred_check
    _
  $region19: #{cnn_cifar_forward.5} parent=0 // pred_check_branch
    %485 = sbr.rel (0) target = $region21
  $region20: #{cnn_cifar_forward.5} parent=0 // pred_region
    _
  $region21: #{cnn_cifar_forward.5} parent=0 // pred_fallthru
    _

// kernel: cnn_cifar_forward.7
$region0: #{cnn_cifar_forward.7}
  #allocation0 [shape = 'u32[]', space=smem, size = 0x4, offset = 0x4, fixed_abs, tag = 'smem constant byte address 0x4 - core index']
  #allocation1 [shape = 'u32[72,128]{1,0:T(1,128)}', space=vmem, size = 0x9000, scoped, tag = 'internal scratch']
  %s0 = inlined_call_operand.vmem [shape: f32[16,150], index: 0, kind: input, shape index: {}]
  %s1 = inlined_call_operand.vmem [shape: f32[150,200], index: 1, kind: input, shape index: {}]
  %s2 = inlined_call_operand.vmem [shape: f32[16,1], index: 2, kind: input, shape index: {}]
  %s3 = inlined_call_operand.vmem [shape: f32[16,200], index: 3, kind: output, shape index: {}]
  %s4 = sld [smem:[#allocation0]]
  $region22: #{cnn_cifar_forward.7} parent=0
    _
  %s6 = ssub.s32 1, %s4
  %s7 = scalar_select 0, %s6, %s4
  // Predicated region
  $region2: #{cnn_cifar_forward.7} parent=0 // pred_check
    _
  $region3: #{cnn_cifar_forward.7} parent=0 // pred_check_branch
    %9 = sbr.rel (0) target = $region5
  $region4: #{cnn_cifar_forward.7} parent=0 // pred_region
    _
  $region5: #{cnn_cifar_forward.7} parent=0 // pred_fallthru
    _
  // Predicated region
  $region6: #{cnn_cifar_forward.7} parent=0 // pred_check
    _
  $region7: #{cnn_cifar_forward.7} parent=0 // pred_check_branch
    %11 = sbr.rel (0) target = $region9
  $region8: #{cnn_cifar_forward.7} parent=0 // pred_region
    _
  $region9: #{cnn_cifar_forward.7} parent=0 // pred_fallthru
    _
  // Predicated region
  $region10: #{cnn_cifar_forward.7} parent=0 // pred_check
    _
  $region11: #{cnn_cifar_forward.7} parent=0 // pred_check_branch
    %13 = sbr.rel (0) target = $region13
  $region12: #{cnn_cifar_forward.7} parent=0 // pred_region
    _
  $region13: #{cnn_cifar_forward.7} parent=0 // pred_fallthru
    _
  %v14 = vld [vmem:[%s0] sm:$0xff]
  %v15 = vld [vmem:[%s0 + $0x8] sm:$0xff]
  %v16 = vld [vmem:[%s0 + $0x10] sm:$0xff]
  %v17 = vld [vmem:[%s0 + $0x18] sm:$0xff]
  %v18 = vld [vmem:[%s1] sm:$0xff]
  %v19 = vld [vmem:[%s1 + $0x8] sm:$0xff]
  %v20 = vld [vmem:[%s1 + $0x10] sm:$0xff]
  %v21 = vld [vmem:[%s1 + $0x18] sm:$0xff]
  %v22 = vld [vmem:[%s1 + $0x20] sm:$0xff]
  %v23 = vld [vmem:[%s1 + $0x28] sm:$0xff]
  %v24 = vld [vmem:[%s1 + $0x30] sm:$0xff]
  %v25 = vld [vmem:[%s1 + $0x38] sm:$0xff]
  %v26 = vld [vmem:[%s1 + $0x40] sm:$0xff]
  %v27 = vld [vmem:[%s1 + $0x48] sm:$0xff]
  %v28 = vld [vmem:[%s1 + $0x50] sm:$0xff]
  %v29 = vld [vmem:[%s1 + $0x58] sm:$0xff]
  %v30 = vld [vmem:[%s1 + $0x60] sm:$0xff]
  %v31 = vld [vmem:[%s1 + $0x68] sm:$0xff]
  %v32 = vld [vmem:[%s1 + $0x70] sm:$0xff]
  %v33 = vld [vmem:[%s1 + $0x78] sm:$0xff]
  %v34 = vld [vmem:[%s1 + $0x80] sm:$0xff]
  %v35 = vld [vmem:[%s1 + $0x88] sm:$0xff]
  %v36 = vld [vmem:[%s1 + $0x90] sm:$0xff]
  %v37 = vld [vmem:[%s1 + $0x98] sm:$0xff]
  %v38 = vld [vmem:[%s1 + $0xa0] sm:$0xff]
  %v39 = vld [vmem:[%s1 + $0xa8] sm:$0xff]
  %v40 = vld [vmem:[%s1 + $0xb0] sm:$0xff]
  %v41 = vld [vmem:[%s1 + $0xb8] sm:$0xff]
  %v42 = vld [vmem:[%s1 + $0xc0] sm:$0xff]
  %v43 = vld [vmem:[%s1 + $0xc8] sm:$0xff]
  %v44 = vld [vmem:[%s1 + $0xd0] sm:$0xff]
  %v45 = vld [vmem:[%s1 + $0xd8] sm:$0xff]
  %v46 = vld [vmem:[%s1 + $0xe0] sm:$0xff]
  %v47 = vld [vmem:[%s1 + $0xe8] sm:$0xff]
  %v48 = vld [vmem:[%s1 + $0xf0] sm:$0xff]
  %v49 = vld [vmem:[%s1 + $0xf8] sm:$0xff]
  %v50 = vld [vmem:[%s1 + $0x100] sm:$0xff]
  %v51 = vld [vmem:[%s1 + $0x108] sm:$0xff]
  %v52 = vld [vmem:[%s1 + $0x110] sm:$0xff]
  %v53 = vld [vmem:[%s1 + $0x118] sm:$0xff]
  %v54 = vld [vmem:[%s1 + $0x120] sm:$0x3f]
  %v55 = vld [vmem:[%s1 + $0x128] sm:$0x3f]
  %v56 = vld [vmem:[%s2] sm:$0xff]
  %v57 = vld [vmem:[%s2 + $0x8] sm:$0xff]
  %59 = vset.pattern.permute.xlu0 0
  %60 = vperm.xlu0 %59, %v56
  %v61 = vpop.permute.xlu0 %60
  %64 = vset.pattern.permute.xlu0 0
  %65 = vperm.xlu0 %64, %v57
  %v66 = vpop.permute.xlu0 %65
  %vm68 = vcmask 179200
  %v70 = vsel %vm68, %v15, 0
  %v73 = vsel %vm68, %v17, 0
  %vm75 = vcmask 1045504
  %v77 = vsel %vm75, %v54, 0
  %v80 = vsel %vm75, %v55, 0
  %82 = vmatpush.msra.mxu0 %v48
  %83 = vmatpush.msra.mxu0 %v46
  %84 = vmatpush.msra.mxu0 %v44
  %85 = vmatpush.msra.mxu0 %v42
  %86 = vmatpush.msra.mxu0 %v40
  %87 = vmatpush.msra.mxu0 %v38
  %88 = vmatpush.msra.mxu0 %v36
  %89 = vmatpush.msra.mxu0 %v34
  %90 = vmatpush.msra.mxu0 %v32
  %91 = vmatpush.msra.mxu0 %v30
  %92 = vmatpush.msra.mxu0 %v28
  %93 = vmatpush.msra.mxu0 %v26
  %94 = vmatpush.msra.mxu0 %v24
  %95 = vmatpush.msra.mxu0 %v22
  %96 = vmatpush.msra.mxu0 %v20
  %97 = vmatpush.msra.mxu0 %v18
  %98 = vmatmul.f32.gmra.mxu0 %v14
  %v99 = vpop.f32.mrf.mxu0
  %v100 = vadd.f32 %v61, %v99
  %101 = vmatmul.f32.gmra.mxu0 %v16
  %v102 = vpop.f32.mrf.mxu0
  %v103 = vadd.f32 %v66, %v102
  %104 = vdwg.mxu0
  %105 = vmatpush.msra.mxu0 0.0
  %106 = vmatpush.msra.mxu0 0.0
  %107 = vmatpush.msra.mxu0 0.0
  %108 = vmatpush.msra.mxu0 0.0
  %109 = vmatpush.msra.mxu0 0.0
  %110 = vmatpush.msra.mxu0 0.0
  %111 = vmatpush.msra.mxu0 0.0
  %112 = vmatpush.msra.mxu0 0.0
  %113 = vmatpush.msra.mxu0 0.0
  %114 = vmatpush.msra.mxu0 0.0
  %115 = vmatpush.msra.mxu0 0.0
  %116 = vmatpush.msra.mxu0 0.0
  %117 = vmatpush.msra.mxu0 0.0
  %118 = vmatpush.msra.mxu0 %v77
  %119 = vmatpush.msra.mxu0 %v52
  %120 = vmatpush.msra.mxu0 %v50
  %121 = vmatmul.f32.gmra.mxu0 %v70
  %v122 = vpop.f32.mrf.mxu0
  %v123 = vadd.f32 %v100, %v122
  %124 = vmatmul.f32.gmra.mxu0 %v73
  %v125 = vpop.f32.mrf.mxu0
  %v126 = vadd.f32 %v103, %v125
  %127 = vdwg.mxu0
  %128 = vmatpush.msra.mxu0 %v49
  %129 = vmatpush.msra.mxu0 %v47
  %130 = vmatpush.msra.mxu0 %v45
  %131 = vmatpush.msra.mxu0 %v43
  %132 = vmatpush.msra.mxu0 %v41
  %133 = vmatpush.msra.mxu0 %v39
  %134 = vmatpush.msra.mxu0 %v37
  %135 = vmatpush.msra.mxu0 %v35
  %136 = vmatpush.msra.mxu0 %v33
  %137 = vmatpush.msra.mxu0 %v31
  %138 = vmatpush.msra.mxu0 %v29
  %139 = vmatpush.msra.mxu0 %v27
  %140 = vmatpush.msra.mxu0 %v25
  %141 = vmatpush.msra.mxu0 %v23
  %142 = vmatpush.msra.mxu0 %v21
  %143 = vmatpush.msra.mxu0 %v19
  %144 = vmatmul.f32.gmra.mxu0 %v14
  %v145 = vpop.f32.mrf.mxu0
  %v146 = vadd.f32 %v61, %v145
  %147 = vmatmul.f32.gmra.mxu0 %v16
  %v148 = vpop.f32.mrf.mxu0
  %v149 = vadd.f32 %v66, %v148
  %150 = vdwg.mxu0
  %151 = vmatpush.msra.mxu0 0.0
  %152 = vmatpush.msra.mxu0 0.0
  %153 = vmatpush.msra.mxu0 0.0
  %154 = vmatpush.msra.mxu0 0.0
  %155 = vmatpush.msra.mxu0 0.0
  %156 = vmatpush.msra.mxu0 0.0
  %157 = vmatpush.msra.mxu0 0.0
  %158 = vmatpush.msra.mxu0 0.0
  %159 = vmatpush.msra.mxu0 0.0
  %160 = vmatpush.msra.mxu0 0.0
  %161 = vmatpush.msra.mxu0 0.0
  %162 = vmatpush.msra.mxu0 0.0
  %163 = vmatpush.msra.mxu0 0.0
  %164 = vmatpush.msra.mxu0 %v80
  %165 = vmatpush.msra.mxu0 %v53
  %166 = vmatpush.msra.mxu0 %v51
  %167 = vmatmul.f32.gmra.mxu0 %v70
  %v168 = vpop.f32.mrf.mxu0
  %v169 = vadd.f32 %v146, %v168
  %170 = vmatmul.f32.gmra.mxu0 %v73
  %v171 = vpop.f32.mrf.mxu0
  %v172 = vadd.f32 %v149, %v171
  %173 = vdwg.mxu0
  %v174 = vmax.f32 %v123, 0.0
  %v175 = vmax.f32 %v169, 0.0
  %v176 = vmax.f32 %v126, 0.0
  %v177 = vmax.f32 %v172, 0.0
  %178 = vst [vmem:[%s3] sm:$0xff] %v174
  %vm179 = vcmask 588800
  %180 = vst.msk [vmem:[%s3 + $0x8] sm:$0xff] %vm179, %v175
  %181 = vst [vmem:[%s3 + $0x10] sm:$0xff] %v176
  %182 = vst.msk [vmem:[%s3 + $0x18] sm:$0xff] %vm179, %v177
  // Predicated region
  $region14: #{cnn_cifar_forward.7} parent=0 // pred_check
    _
  $region15: #{cnn_cifar_forward.7} parent=0 // pred_check_branch
    %184 = sbr.rel (0) target = $region17
  $region16: #{cnn_cifar_forward.7} parent=0 // pred_region
    _
  $region17: #{cnn_cifar_forward.7} parent=0 // pred_fallthru
    _
  // Predicated region
  $region18: #{cnn_cifar_forward.7} parent=0 // pred_check
    _
  $region19: #{cnn_cifar_forward.7} parent=0 // pred_check_branch
    %186 = sbr.rel (0) target = $region21
  $region20: #{cnn_cifar_forward.7} parent=0 // pred_region
    _
  $region21: #{cnn_cifar_forward.7} parent=0 // pred_fallthru
    _

// kernel: cnn_cifar_forward.8
$region0: #{cnn_cifar_forward.8}
  #allocation0 [shape = 'u32[]', space=smem, size = 0x4, offset = 0x4, fixed_abs, tag = 'smem constant byte address 0x4 - core index']
  #allocation1 [shape = 'u32[72,128]{1,0:T(1,128)}', space=vmem, size = 0x9000, scoped, tag = 'internal scratch']
  %s0 = inlined_call_operand.vmem [shape: f32[32,25], index: 0, kind: input, shape index: {}]
  %s1 = inlined_call_operand.vmem [shape: f32[32,25], index: 1, kind: input, shape index: {}]
  %s2 = inlined_call_operand.vmem [shape: f32[32,25], index: 2, kind: input, shape index: {}]
  %s3 = inlined_call_operand.vmem [shape: f32[32,25], index: 3, kind: input, shape index: {}]
  %s4 = inlined_call_operand.vmem [shape: f32[32,25], index: 4, kind: output, shape index: {}]
  %s5 = sld [smem:[#allocation0]]
  $region26: #{cnn_cifar_forward.8} parent=0
    _
  %s7 = ssub.s32 1, %s5
  %s8 = scalar_select 0, %s7, %s5
  // Predicated region
  $region2: #{cnn_cifar_forward.8} parent=0 // pred_check
    _
  $region3: #{cnn_cifar_forward.8} parent=0 // pred_check_branch
    %10 = sbr.rel (0) target = $region5
  $region4: #{cnn_cifar_forward.8} parent=0 // pred_region
    _
  $region5: #{cnn_cifar_forward.8} parent=0 // pred_fallthru
    _
  // Predicated region
  $region6: #{cnn_cifar_forward.8} parent=0 // pred_check
    _
  $region7: #{cnn_cifar_forward.8} parent=0 // pred_check_branch
    %12 = sbr.rel (0) target = $region9
  $region8: #{cnn_cifar_forward.8} parent=0 // pred_region
    _
  $region9: #{cnn_cifar_forward.8} parent=0 // pred_fallthru
    _
  // Predicated region
  $region10: #{cnn_cifar_forward.8} parent=0 // pred_check
    _
  $region11: #{cnn_cifar_forward.8} parent=0 // pred_check_branch
    %14 = sbr.rel (0) target = $region13
  $region12: #{cnn_cifar_forward.8} parent=0 // pred_region
    _
  $region13: #{cnn_cifar_forward.8} parent=0 // pred_fallthru
    _
  // Predicated region
  $region14: #{cnn_cifar_forward.8} parent=0 // pred_check
    _
  $region15: #{cnn_cifar_forward.8} parent=0 // pred_check_branch
    %16 = sbr.rel (0) target = $region17
  $region16: #{cnn_cifar_forward.8} parent=0 // pred_region
    _
  $region17: #{cnn_cifar_forward.8} parent=0 // pred_fallthru
    _
  %v17 = vld [vmem:[%s0] sm:$0xff]
  %v18 = vld [vmem:[%s0 + $0x8] sm:$0xff]
  %v19 = vld [vmem:[%s0 + $0x10] sm:$0xff]
  %v20 = vld [vmem:[%s0 + $0x18] sm:$0xff]
  %v21 = vld [vmem:[%s1] sm:$0xff]
  %v22 = vld [vmem:[%s1 + $0x8] sm:$0xff]
  %v23 = vld [vmem:[%s1 + $0x10] sm:$0xff]
  %v24 = vld [vmem:[%s1 + $0x18] sm:$0xff]
  %v25 = vmax.f32 %v17, %v21
  %v26 = vmax.f32 %v18, %v22
  %v27 = vmax.f32 %v19, %v23
  %v28 = vmax.f32 %v20, %v24
  %v29 = vld [vmem:[%s2] sm:$0xff]
  %v30 = vld [vmem:[%s2 + $0x8] sm:$0xff]
  %v31 = vld [vmem:[%s2 + $0x10] sm:$0xff]
  %v32 = vld [vmem:[%s2 + $0x18] sm:$0xff]
  %v33 = vld [vmem:[%s3] sm:$0xff]
  %v34 = vld [vmem:[%s3 + $0x8] sm:$0xff]
  %v35 = vld [vmem:[%s3 + $0x10] sm:$0xff]
  %v36 = vld [vmem:[%s3 + $0x18] sm:$0xff]
  %v37 = vmax.f32 %v29, %v33
  %v38 = vmax.f32 %v30, %v34
  %v39 = vmax.f32 %v31, %v35
  %v40 = vmax.f32 %v32, %v36
  %v41 = vmax.f32 %v25, %v37
  %v42 = vmax.f32 %v26, %v38
  %v43 = vmax.f32 %v27, %v39
  %v44 = vmax.f32 %v28, %v40
  %vm45 = vcmask 203776
  %46 = vst.msk [vmem:[%s4] sm:$0xff] %vm45, %v41
  %47 = vst.msk [vmem:[%s4 + $0x8] sm:$0xff] %vm45, %v42
  %48 = vst.msk [vmem:[%s4 + $0x10] sm:$0xff] %vm45, %v43
  %49 = vst.msk [vmem:[%s4 + $0x18] sm:$0xff] %vm45, %v44
  // Predicated region
  $region18: #{cnn_cifar_forward.8} parent=0 // pred_check
    _
  $region19: #{cnn_cifar_forward.8} parent=0 // pred_check_branch
    %51 = sbr.rel (0) target = $region21
  $region20: #{cnn_cifar_forward.8} parent=0 // pred_region
    _
  $region21: #{cnn_cifar_forward.8} parent=0 // pred_fallthru
    _
  // Predicated region
  $region22: #{cnn_cifar_forward.8} parent=0 // pred_check
    _
  $region23: #{cnn_cifar_forward.8} parent=0 // pred_check_branch
    %53 = sbr.rel (0) target = $region25
  $region24: #{cnn_cifar_forward.8} parent=0 // pred_region
    _
  $region25: #{cnn_cifar_forward.8} parent=0 // pred_fallthru
    _

// kernel: cnn_cifar_forward.9
$region0: #{cnn_cifar_forward.9}
  #allocation0 [shape = 'u32[]', space=smem, size = 0x4, offset = 0x4, fixed_abs, tag = 'smem constant byte address 0x4 - core index']
  #allocation1 [shape = 'u32[72,128]{1,0:T(1,128)}', space=vmem, size = 0x9000, scoped, tag = 'internal scratch']
  %s0 = inlined_call_operand.vmem [shape: f32[2,400], index: 0, kind: input, shape index: {}]
  %s1 = inlined_call_operand.vmem [shape: f32[400,120], index: 1, kind: input, shape index: {}]
  %s2 = inlined_call_operand.vmem [shape: f32[1,120], index: 2, kind: input, shape index: {}]
  %s3 = inlined_call_operand.vmem [shape: f32[120,100], index: 3, kind: input, shape index: {}]
  %s4 = inlined_call_operand.vmem [shape: f32[1,100], index: 4, kind: input, shape index: {}]
  %s5 = inlined_call_operand.vmem [shape: f32[100,10], index: 5, kind: input, shape index: {}]
  %s6 = inlined_call_operand.vmem [shape: f32[1,10], index: 6, kind: input, shape index: {}]
  %s7 = inlined_call_operand.vmem [shape: s32[2,1], index: 7, kind: input, shape index: {}]
  %s8 = inlined_call_operand.hbm [shape: f32[2,10], index: 8, kind: output, shape index: {0}]
  %s9 = inlined_call_operand.hbm [shape: f32[1,1], index: 9, kind: output, shape index: {1}]
  %10 = xla_tuple %s8, %s9
  %s11 = sld [smem:[#allocation0]]
  $region50: #{cnn_cifar_forward.9} parent=0
    _
  %s13 = ssub.s32 1, %s11
  %s14 = scalar_select 0, %s13, %s11
  $region1: #{cnn_cifar_forward.9} parent=0
    #allocation2 [shape = 'u8[1024]{0}', space=vmem, size = 0x400, scoped, tag = 'output window, operand 0, single buffered']
    #allocation3 [shape = 's32[1]{0}', space=sflag, size = 0x4, scoped, tag = 'scoped memory for cnn_cifar_forward.9']
    #allocation4 [shape = 'u8[512]{0}', space=vmem, size = 0x400, scoped, tag = 'output window, operand 1, single buffered']
    #allocation5 [shape = 's32[1]{0}', space=sflag, size = 0x4, scoped, tag = 'scoped memory for cnn_cifar_forward.9']
    %15 = vsyncpa [#allocation3], 0
    %16 = vsyncpa [#allocation5], 0
    // Predicated region
    $region2: #{cnn_cifar_forward.9} parent=1 // pred_check
      _
    $region3: #{cnn_cifar_forward.9} parent=1 // pred_check_branch
      %18 = sbr.rel (0) target = $region5
    $region4: #{cnn_cifar_forward.9} parent=1 // pred_region
      _
    $region5: #{cnn_cifar_forward.9} parent=1 // pred_fallthru
      _
    // Predicated region
    $region6: #{cnn_cifar_forward.9} parent=1 // pred_check
      _
    $region7: #{cnn_cifar_forward.9} parent=1 // pred_check_branch
      %20 = sbr.rel (0) target = $region9
    $region8: #{cnn_cifar_forward.9} parent=1 // pred_region
      _
    $region9: #{cnn_cifar_forward.9} parent=1 // pred_fallthru
      _
    // Predicated region
    $region10: #{cnn_cifar_forward.9} parent=1 // pred_check
      _
    $region11: #{cnn_cifar_forward.9} parent=1 // pred_check_branch
      %22 = sbr.rel (0) target = $region13
    $region12: #{cnn_cifar_forward.9} parent=1 // pred_region
      _
    $region13: #{cnn_cifar_forward.9} parent=1 // pred_fallthru
      _
    // Predicated region
    $region14: #{cnn_cifar_forward.9} parent=1 // pred_check
      _
    $region15: #{cnn_cifar_forward.9} parent=1 // pred_check_branch
      %24 = sbr.rel (0) target = $region17
    $region16: #{cnn_cifar_forward.9} parent=1 // pred_region
      _
    $region17: #{cnn_cifar_forward.9} parent=1 // pred_fallthru
      _
    // Predicated region
    $region18: #{cnn_cifar_forward.9} parent=1 // pred_check
      _
    $region19: #{cnn_cifar_forward.9} parent=1 // pred_check_branch
      %26 = sbr.rel (0) target = $region21
    $region20: #{cnn_cifar_forward.9} parent=1 // pred_region
      _
    $region21: #{cnn_cifar_forward.9} parent=1 // pred_fallthru
      _
    // Predicated region
    $region22: #{cnn_cifar_forward.9} parent=1 // pred_check
      _
    $region23: #{cnn_cifar_forward.9} parent=1 // pred_check_branch
      %28 = sbr.rel (0) target = $region25
    $region24: #{cnn_cifar_forward.9} parent=1 // pred_region
      _
    $region25: #{cnn_cifar_forward.9} parent=1 // pred_fallthru
      _
    // Predicated region
    $region26: #{cnn_cifar_forward.9} parent=1 // pred_check
      _
    $region27: #{cnn_cifar_forward.9} parent=1 // pred_check_branch
      %30 = sbr.rel (0) target = $region29
    $region28: #{cnn_cifar_forward.9} parent=1 // pred_region
      _
    $region29: #{cnn_cifar_forward.9} parent=1 // pred_fallthru
      _
    // Predicated region
    $region30: #{cnn_cifar_forward.9} parent=1 // pred_check
      _
    $region31: #{cnn_cifar_forward.9} parent=1 // pred_check_branch
      %32 = sbr.rel (0) target = $region33
    $region32: #{cnn_cifar_forward.9} parent=1 // pred_region
      _
    $region33: #{cnn_cifar_forward.9} parent=1 // pred_fallthru
      _
    %v33 = vld [vmem:[%s0] sm:$0xff]
    %v34 = vld [vmem:[%s1] sm:$0xff]
    %v35 = vld [vmem:[%s1 + $0x8] sm:$0xff]
    %v36 = vld [vmem:[%s1 + $0x10] sm:$0xff]
    %v37 = vld [vmem:[%s1 + $0x18] sm:$0xff]
    %v38 = vld [vmem:[%s1 + $0x20] sm:$0xff]
    %v39 = vld [vmem:[%s1 + $0x28] sm:$0xff]
    %v40 = vld [vmem:[%s1 + $0x30] sm:$0xff]
    %v41 = vld [vmem:[%s1 + $0x38] sm:$0xff]
    %v42 = vld [vmem:[%s1 + $0x40] sm:$0xff]
    %v43 = vld [vmem:[%s1 + $0x48] sm:$0xff]
    %v44 = vld [vmem:[%s1 + $0x50] sm:$0xff]
    %v45 = vld [vmem:[%s1 + $0x58] sm:$0xff]
    %v46 = vld [vmem:[%s1 + $0x60] sm:$0xff]
    %v47 = vld [vmem:[%s1 + $0x68] sm:$0xff]
    %v48 = vld [vmem:[%s1 + $0x70] sm:$0xff]
    %v49 = vld [vmem:[%s1 + $0x78] sm:$0xff]
    %v50 = vld [vmem:[%s1 + $0x80] sm:$0xff]
    %v51 = vld [vmem:[%s1 + $0x88] sm:$0xff]
    %v52 = vld [vmem:[%s1 + $0x90] sm:$0xff]
    %v53 = vld [vmem:[%s1 + $0x98] sm:$0xff]
    %v54 = vld [vmem:[%s1 + $0xa0] sm:$0xff]
    %v55 = vld [vmem:[%s1 + $0xa8] sm:$0xff]
    %v56 = vld [vmem:[%s1 + $0xb0] sm:$0xff]
    %v57 = vld [vmem:[%s1 + $0xb8] sm:$0xff]
    %v58 = vld [vmem:[%s1 + $0xc0] sm:$0xff]
    %v59 = vld [vmem:[%s1 + $0xc8] sm:$0xff]
    %v60 = vld [vmem:[%s1 + $0xd0] sm:$0xff]
    %v61 = vld [vmem:[%s1 + $0xd8] sm:$0xff]
    %v62 = vld [vmem:[%s1 + $0xe0] sm:$0xff]
    %v63 = vld [vmem:[%s1 + $0xe8] sm:$0xff]
    %v64 = vld [vmem:[%s1 + $0xf0] sm:$0xff]
    %v65 = vld [vmem:[%s1 + $0xf8] sm:$0xff]
    %v66 = vld [vmem:[%s1 + $0x100] sm:$0xff]
    %v67 = vld [vmem:[%s1 + $0x108] sm:$0xff]
    %v68 = vld [vmem:[%s1 + $0x110] sm:$0xff]
    %v69 = vld [vmem:[%s1 + $0x118] sm:$0xff]
    %v70 = vld [vmem:[%s1 + $0x120] sm:$0xff]
    %v71 = vld [vmem:[%s1 + $0x128] sm:$0xff]
    %v72 = vld [vmem:[%s1 + $0x130] sm:$0xff]
    %v73 = vld [vmem:[%s1 + $0x138] sm:$0xff]
    %v74 = vld [vmem:[%s1 + $0x140] sm:$0xff]
    %v75 = vld [vmem:[%s1 + $0x148] sm:$0xff]
    %v76 = vld [vmem:[%s1 + $0x150] sm:$0xff]
    %v77 = vld [vmem:[%s1 + $0x158] sm:$0xff]
    %v78 = vld [vmem:[%s1 + $0x160] sm:$0xff]
    %v79 = vld [vmem:[%s1 + $0x168] sm:$0xff]
    %v80 = vld [vmem:[%s1 + $0x170] sm:$0xff]
    %v81 = vld [vmem:[%s1 + $0x178] sm:$0xff]
    %v82 = vld [vmem:[%s1 + $0x180] sm:$0xff]
    %v83 = vld [vmem:[%s1 + $0x188] sm:$0xff]
    %v84 = vld [vmem:[%s2] sm:$0x1]
    %v86 = vperm.slane %v84, 0
    %89 = vst [vmem:[#allocation1] ss:$4 sm:$0xff] %v33
    %v90 = vld.sshfl [vmem:[#allocation1] sm:$0xff pattern:$0x73625140]
    %v91 = vld.sshfl [vmem:[#allocation1 + $0x8] sm:$0xff pattern:$0x73625140]
    %v92 = vld.sshfl [vmem:[#allocation1 + $0x10] sm:$0xff pattern:$0x73625140]
    %v93 = vld.sshfl [vmem:[#allocation1 + $0x18] sm:$0xff pattern:$0x73625140]
    %vm97 = vcmask 130048
    %v98 = vsel %vm97, %v93, 0
    %100 = vmatpush.msra.mxu0 %v49
    %101 = vmatpush.msra.mxu0 %v48
    %102 = vmatpush.msra.mxu0 %v47
    %103 = vmatpush.msra.mxu0 %v46
    %104 = vmatpush.msra.mxu0 %v45
    %105 = vmatpush.msra.mxu0 %v44
    %106 = vmatpush.msra.mxu0 %v43
    %107 = vmatpush.msra.mxu0 %v42
    %108 = vmatpush.msra.mxu0 %v41
    %109 = vmatpush.msra.mxu0 %v40
    %110 = vmatpush.msra.mxu0 %v39
    %111 = vmatpush.msra.mxu0 %v38
    %112 = vmatpush.msra.mxu0 %v37
    %113 = vmatpush.msra.mxu0 %v36
    %114 = vmatpush.msra.mxu0 %v35
    %115 = vmatpush.msra.mxu0 %v34
    %116 = vmatmul.f32.gmra.mxu0 %v90
    %v117 = vpop.f32.mrf.mxu0
    %v118 = vadd.f32 %v86, %v117
    %119 = vdwg.mxu0
    %120 = vmatpush.msra.mxu0 %v65
    %121 = vmatpush.msra.mxu0 %v64
    %122 = vmatpush.msra.mxu0 %v63
    %123 = vmatpush.msra.mxu0 %v62
    %124 = vmatpush.msra.mxu0 %v61
    %125 = vmatpush.msra.mxu0 %v60
    %126 = vmatpush.msra.mxu0 %v59
    %127 = vmatpush.msra.mxu0 %v58
    %128 = vmatpush.msra.mxu0 %v57
    %129 = vmatpush.msra.mxu0 %v56
    %130 = vmatpush.msra.mxu0 %v55
    %131 = vmatpush.msra.mxu0 %v54
    %132 = vmatpush.msra.mxu0 %v53
    %133 = vmatpush.msra.mxu0 %v52
    %134 = vmatpush.msra.mxu0 %v51
    %135 = vmatpush.msra.mxu0 %v50
    %136 = vmatmul.f32.gmra.mxu0 %v91
    %v137 = vpop.f32.mrf.mxu0
    %v138 = vadd.f32 %v118, %v137
    %139 = vdwg.mxu0
    %140 = vmatpush.msra.mxu0 %v81
    %141 = vmatpush.msra.mxu0 %v80
    %142 = vmatpush.msra.mxu0 %v79
    %143 = vmatpush.msra.mxu0 %v78
    %144 = vmatpush.msra.mxu0 %v77
    %145 = vmatpush.msra.mxu0 %v76
    %146 = vmatpush.msra.mxu0 %v75
    %147 = vmatpush.msra.mxu0 %v74
    %148 = vmatpush.msra.mxu0 %v73
    %149 = vmatpush.msra.mxu0 %v72
    %150 = vmatpush.msra.mxu0 %v71
    %151 = vmatpush.msra.mxu0 %v70
    %152 = vmatpush.msra.mxu0 %v69
    %153 = vmatpush.msra.mxu0 %v68
    %154 = vmatpush.msra.mxu0 %v67
    %155 = vmatpush.msra.mxu0 %v66
    %156 = vmatmul.f32.gmra.mxu0 %v92
    %v157 = vpop.f32.mrf.mxu0
    %v158 = vadd.f32 %v138, %v157
    %159 = vdwg.mxu0
    %160 = vmatpush.msra.mxu0 0.0
    %161 = vmatpush.msra.mxu0 0.0
    %162 = vmatpush.msra.mxu0 0.0
    %163 = vmatpush.msra.mxu0 0.0
    %164 = vmatpush.msra.mxu0 0.0
    %165 = vmatpush.msra.mxu0 0.0
    %166 = vmatpush.msra.mxu0 0.0
    %167 = vmatpush.msra.mxu0 0.0
    %168 = vmatpush.msra.mxu0 0.0
    %169 = vmatpush.msra.mxu0 0.0
    %170 = vmatpush.msra.mxu0 0.0
    %171 = vmatpush.msra.mxu0 0.0
    %172 = vmatpush.msra.mxu0 0.0
    %173 = vmatpush.msra.mxu0 0.0
    %174 = vmatpush.msra.mxu0 %v83
    %175 = vmatpush.msra.mxu0 %v82
    %176 = vmatmul.f32.gmra.mxu0 %v98
    %v177 = vpop.f32.mrf.mxu0
    %v178 = vadd.f32 %v158, %v177
    %179 = vdwg.mxu0
    %v180 = vmax.f32 %v178, 0.0
    %v181 = vld [vmem:[%s3] sm:$0xff]
    %v182 = vld [vmem:[%s3 + $0x8] sm:$0xff]
    %v183 = vld [vmem:[%s3 + $0x10] sm:$0xff]
    %v184 = vld [vmem:[%s3 + $0x18] sm:$0xff]
    %v185 = vld [vmem:[%s3 + $0x20] sm:$0xff]
    %v186 = vld [vmem:[%s3 + $0x28] sm:$0xff]
    %v187 = vld [vmem:[%s3 + $0x30] sm:$0xff]
    %v188 = vld [vmem:[%s3 + $0x38] sm:$0xff]
    %v189 = vld [vmem:[%s3 + $0x40] sm:$0xff]
    %v190 = vld [vmem:[%s3 + $0x48] sm:$0xff]
    %v191 = vld [vmem:[%s3 + $0x50] sm:$0xff]
    %v192 = vld [vmem:[%s3 + $0x58] sm:$0xff]
    %v193 = vld [vmem:[%s3 + $0x60] sm:$0xff]
    %v194 = vld [vmem:[%s3 + $0x68] sm:$0xff]
    %v195 = vld [vmem:[%s3 + $0x70] sm:$0xff]
    %v196 = vld [vmem:[%s4] sm:$0x1]
    %v198 = vperm.slane %v196, 0
    %vm200 = vcmask 982016
    %v202 = vsel %vm200, %v180, 0
    %204 = vmatpush.msra.mxu0 0.0
    %205 = vmatpush.msra.mxu0 %v195
    %206 = vmatpush.msra.mxu0 %v194
    %207 = vmatpush.msra.mxu0 %v193
    %208 = vmatpush.msra.mxu0 %v192
    %209 = vmatpush.msra.mxu0 %v191
    %210 = vmatpush.msra.mxu0 %v190
    %211 = vmatpush.msra.mxu0 %v189
    %212 = vmatpush.msra.mxu0 %v188
    %213 = vmatpush.msra.mxu0 %v187
    %214 = vmatpush.msra.mxu0 %v186
    %215 = vmatpush.msra.mxu0 %v185
    %216 = vmatpush.msra.mxu0 %v184
    %217 = vmatpush.msra.mxu0 %v183
    %218 = vmatpush.msra.mxu0 %v182
    %219 = vmatpush.msra.mxu0 %v181
    %220 = vmatmul.f32.gmra.mxu0 %v202
    %v221 = vpop.f32.mrf.mxu0
    %v222 = vadd.f32 %v198, %v221
    %223 = vdwg.mxu0
    %v224 = vmax.f32 %v222, 0.0
    %v225 = vld [vmem:[%s5] sm:$0xff]
    %v226 = vld [vmem:[%s5 + $0x8] sm:$0xff]
    %v227 = vld [vmem:[%s5 + $0x10] sm:$0xff]
    %v228 = vld [vmem:[%s5 + $0x18] sm:$0xff]
    %v229 = vld [vmem:[%s5 + $0x20] sm:$0xff]
    %v230 = vld [vmem:[%s5 + $0x28] sm:$0xff]
    %v231 = vld [vmem:[%s5 + $0x30] sm:$0xff]
    %v232 = vld [vmem:[%s5 + $0x38] sm:$0xff]
    %v233 = vld [vmem:[%s5 + $0x40] sm:$0xff]
    %v234 = vld [vmem:[%s5 + $0x48] sm:$0xff]
    %v235 = vld [vmem:[%s5 + $0x50] sm:$0xff]
    %v236 = vld [vmem:[%s5 + $0x58] sm:$0xff]
    %v237 = vld [vmem:[%s5 + $0x60] sm:$0xf]
    %v238 = vld [vmem:[%s6] sm:$0x1]
    %v240 = vperm.slane %v238, 0
    %vm242 = vcmask 818176
    %v244 = vsel %vm242, %v224, 0
    %vm246 = vcmask 1043456
    %v248 = vsel %vm246, %v237, 0
    %250 = vmatpush.msra.mxu0 0.0
    %251 = vmatpush.msra.mxu0 0.0
    %252 = vmatpush.msra.mxu0 0.0
    %253 = vmatpush.msra.mxu0 %v248
    %254 = vmatpush.msra.mxu0 %v236
    %255 = vmatpush.msra.mxu0 %v235
    %256 = vmatpush.msra.mxu0 %v234
    %257 = vmatpush.msra.mxu0 %v233
    %258 = vmatpush.msra.mxu0 %v232
    %259 = vmatpush.msra.mxu0 %v231
    %260 = vmatpush.msra.mxu0 %v230
    %261 = vmatpush.msra.mxu0 %v229
    %262 = vmatpush.msra.mxu0 %v228
    %263 = vmatpush.msra.mxu0 %v227
    %264 = vmatpush.msra.mxu0 %v226
    %265 = vmatpush.msra.mxu0 %v225
    %266 = vmatmul.f32.gmra.mxu0 %v244
    %v267 = vpop.f32.mrf.mxu0
    %v268 = vadd.f32 %v240, %v267
    %269 = vdwg.mxu0
    %vm270 = vcmask 74752
    %v271 = vsel %vm270, %v268, -inf
    %272 = vmax.xlane.f32.xlu0 %v271
    %v273 = vpop.xlane.xlu0 %272
    %v274 = vsub.f32 %v268, %v273
    %v275 = vmul.f32 %v274, 1.442695
    %v276 = vpow.pop %v275
    %v277 = vsel %vm270, %v276, 0.0
    %278 = vadd.xlane.f32.xlu0 %v277
    %v279 = vpop.xlane.xlu0 %278
    %v280 = vlog2.pop %v279
    %v281 = vmul.f32 %v280, 0.6931472
    %v282 = vsub.f32 %v274, %v281
    %283 = vst.msk [vmem:[#allocation2] sm:$0x3] %vm270, %v282
    %v284 = vsel %vm270, %v282, -inf
    %285 = vmax.xlane.f32.xlu0 %v284
    %v286 = vpop.xlane.xlu0 %285
    %v287 = vsub.f32 %v282, %v286
    %v288 = vmul.f32 %v287, 1.442695
    %v289 = vpow.pop %v288
    %v290 = vsel %vm270, %v289, 0.0
    %291 = vadd.xlane.f32.xlu0 %v290
    %v292 = vpop.xlane.xlu0 %291
    %v293 = vlog2.pop %v292
    %v294 = vmul.f32 %v293, 0.6931472
    %v295 = vadd.f32 %v286, %v294
    %v296 = vsub.f32 %v282, %v295
    %v297 = vlaneseq
    %v298 = vand.u32 %v297, 127
    %v299 = vld [vmem:[%s7] sm:$0x3]
    %300 = vset.pattern.permute.xlu0 0
    %301 = vperm.xlu0 %300, %v299
    %v302 = vpop.permute.xlu0 %301
    %vm303 = vcmp.eq.s32.totalorder %v298, %v302
    %v304 = vsel %vm303, %v296, 0.0
    %v305 = vsel %vm270, %v304, 0.0
    %306 = vadd.xlane.f32.xlu0 %v305
    %v307 = vpop.xlane.xlu0 %306
    %vm308 = vcmask 1041408
    %v309 = vsel %vm308, %v307, 0.0
    %v310 = vrot.slane %v309, 4
    %v311 = vadd.f32 %v309, %v310
    %v312 = vrot.slane %v311, 2
    %v313 = vadd.f32 %v311, %v312
    %v314 = vrot.slane %v313, 1
    %v315 = vadd.f32 %v313, %v314
    %v316 = vsub.f32 0.0, %v315
    %v317 = vmul.f32 %v316, 0.5
    %vm318 = vcmask 0
    %319 = vst.msk [vmem:[#allocation4] sm:$0x1] %vm318, %v317
    // Predicated region
    $region34: #{cnn_cifar_forward.9} parent=1 // pred_check
      _
    $region35: #{cnn_cifar_forward.9} parent=1 // pred_check_branch
      %321 = sbr.rel (0) target = $region37
    $region36: #{cnn_cifar_forward.9} parent=1 // pred_region
      %323 = vsyncadd [#allocation3], 0
      %s325 = sshll.u32 [#allocation2], 4
      %s326 = int_to_ptr.vmem [resolvable:$true] %s325
      %s327 = sshll.u32 %s8, 4
      %s328 = int_to_ptr.hbm [resolvable:$true] %s327
      %330 = dma.vmem_to_hbm [thread:$0]  %s326, 32, %s328, [#allocation3]
    $region37: #{cnn_cifar_forward.9} parent=1 // pred_fallthru
      _
    // Predicated region
    $region38: #{cnn_cifar_forward.9} parent=1 // pred_check
      _
    $region39: #{cnn_cifar_forward.9} parent=1 // pred_check_branch
      %332 = sbr.rel (0) target = $region41
    $region40: #{cnn_cifar_forward.9} parent=1 // pred_region
      %334 = vsyncadd [#allocation5], 0
      %s336 = sshll.u32 [#allocation4], 4
      %s337 = int_to_ptr.vmem [resolvable:$true] %s336
      %s338 = sshll.u32 %s9, 4
      %s339 = int_to_ptr.hbm [resolvable:$true] %s338
      %341 = dma.vmem_to_hbm [thread:$0]  %s337, 16, %s339, [#allocation5]
    $region41: #{cnn_cifar_forward.9} parent=1 // pred_fallthru
      _
    // Predicated region
    $region42: #{cnn_cifar_forward.9} parent=1 // pred_check
      _
    $region43: #{cnn_cifar_forward.9} parent=1 // pred_check_branch
      %343 = sbr.rel (0) target = $region45
    $region44: #{cnn_cifar_forward.9} parent=1 // pred_region
      %345 = dma.done [#allocation3], 32
    $region45: #{cnn_cifar_forward.9} parent=1 // pred_fallthru
      _
    // Predicated region
    $region46: #{cnn_cifar_forward.9} parent=1 // pred_check
      _
    $region47: #{cnn_cifar_forward.9} parent=1 // pred_check_branch
      %347 = sbr.rel (0) target = $region49
    $region48: #{cnn_cifar_forward.9} parent=1 // pred_region
      %349 = dma.done [#allocation5], 16
    $region49: #{cnn_cifar_forward.9} parent=1 // pred_fallthru
      _
    %350 = vsyncpa [#allocation3], 1
    %351 = vsyncpa [#allocation5], 1

</llo_original>
